<compile_context>
chip_gen: v6e
topology: v6e:2x2x1
jax: 0.10.0
libtpu: 0.0.40
codegen_flags: <defaults>
</compile_context>

<pallas_src>
import functools

import jax
import jax.numpy as jnp
from jax.experimental import pallas as pl
from jax.experimental.pallas import tpu as pltpu


def _round_up(n, m):
    return ((n + m - 1) // m) * m


def _make_lstm_branch_kernel(num_layers, Bp, T, hidden, out_dim):
    """Build the Pallas kernel body (closes over static sizes)."""
    H = hidden
    H4 = 4 * hidden
    L = num_layers
    n_in = 1 + 3 * L + 2

    def kernel(*refs):
        # refs layout:
        #   refs[0]                : x_flat  (T*Bp, Fp)   time-major flat, padded
        #   refs[1 + 3*l]          : w_ih[l] (D_l, 4H)    gates i,f,g,o on lanes
        #   refs[2 + 3*l]          : w_hh[l] (H, 4H)
        #   refs[3 + 3*l]          : bias[l] (1, 4H)      (= b_ih + b_hh)
        #   refs[1 + 3*L]          : w_fc    (H, out_dim)
        #   refs[2 + 3*L]          : b_fc    (1, out_dim)
        #   refs[n_in]             : out     (Bp, out_dim)
        x_ref = refs[0]
        out_ref = refs[n_in]

        w_ih = [refs[1 + 3 * l][...] for l in range(L)]
        w_hh = [refs[2 + 3 * l][...] for l in range(L)]
        bias = [refs[3 + 3 * l][...] for l in range(L)]
        w_fc = refs[1 + 3 * L][...]
        b_fc = refs[2 + 3 * L][...]

        # Hoisted layer-0 input projection for all T timesteps: one lane-dense
        # matmul, bias folded in once.  (T*Bp, 4H) f32 = T*Bp*512 B (32 KB at
        # T=8, Bp=8) -> lives in vregs/VMEM; per-step slices below are static
        # and (8, 128)-tile aligned.
        proj0 = (
            jnp.dot(x_ref[...], w_ih[0], preferred_element_type=jnp.float32)
            + bias[0]
        ).reshape(T, Bp, H4)

        h = [jnp.zeros((Bp, H), jnp.float32) for _ in range(L)]
        c = [jnp.zeros((Bp, H), jnp.float32) for _ in range(L)]
        pending = [None] * L  # pending[l]: input projection for layer l's next step

        # Layer-wavefront: iteration s runs layer l's timestep t = s - l, so the
        # serial chain is T + L - 1 dependent steps instead of L * T.
        for s in range(T + L - 1):
            # Iterate layers high -> low so layer l+1 consumes pending[l+1]
            # (produced in the previous wavefront iteration) before layer l
            # overwrites it for the next one.
            for l in range(L - 1, -1, -1):
                t = s - l
                if not (0 <= t < T):
                    continue
                z_in = proj0[t] if l == 0 else pending[l]
                # Only serial matmul on the chain: (Bp, H) @ (H, 4H) -> (Bp, 128).
                z = z_in + jnp.dot(h[l], w_hh[l], preferred_element_type=jnp.float32)
                # Two full-vreg EUP passes, then per-gate lane slices.
                sg = jax.nn.sigmoid(z)
                th = jnp.tanh(z)
                i_g = sg[:, 0 * H:1 * H]
                f_g = sg[:, 1 * H:2 * H]
                g_g = th[:, 2 * H:3 * H]
                o_g = sg[:, 3 * H:4 * H]
                c[l] = f_g * c[l] + i_g * g_g
                h[l] = o_g * jnp.tanh(c[l])
                if l + 1 < L:
                    # On-the-fly next-layer input projection: lane-dense
                    # (Bp, H) @ (H, 4H); independent of this layer's recurrence,
                    # so it fills the otherwise-idle MXU slot.
                    pending[l + 1] = (
                        jnp.dot(h[l], w_ih[l + 1], preferred_element_type=jnp.float32)
                        + bias[l + 1]
                    )

        # fc + relu on the last timestep hidden state of the last layer.
        y = jnp.dot(h[L - 1], w_fc, preferred_element_type=jnp.float32) + b_fc
        out_ref[...] = jnp.maximum(y, 0.0)

    return kernel


def init_lstm_branch_params(key, input_size, hidden_size, num_layers, out_dim=64):
    """Deterministic init mimicking PyTorch's U(-1/sqrt(H), 1/sqrt(H)).

    Weights are stored in the fused, lane-dense form the kernel consumes:
      w_ih: (D_l, 4H), w_hh: (H, 4H)  -- gates i,f,g,o concatenated on last dim
      bias: (1, 4H)                    -- b_ih + b_hh
      fc  : (H, out_dim), (1, out_dim)
    """
    bound = 1.0 / jnp.sqrt(jnp.float32(hidden_size))
    params = {"layers": []}
    for l in range(num_layers):
        d_in = input_size if l == 0 else hidden_size
        key, k1, k2, k3, k4 = jax.random.split(key, 5)
        # PyTorch shapes: weight_ih (4H, D), weight_hh (4H, H), biases (4H,)
        w_ih = jax.random.uniform(k1, (4 * hidden_size, d_in), jnp.float32, -bound, bound)
        w_hh = jax.random.uniform(k2, (4 * hidden_size, hidden_size), jnp.float32, -bound, bound)
        b_ih = jax.random.uniform(k3, (4 * hidden_size,), jnp.float32, -bound, bound)
        b_hh = jax.random.uniform(k4, (4 * hidden_size,), jnp.float32, -bound, bound)
        # Fused lane-dense form: gates (i, f, g, o) on the last (lane) dim.
        w_ih_f = w_ih.T                                   # (D_l, 4H)
        w_hh_f = w_hh.T                                   # (H, 4H)
        b_f = (b_ih + b_hh).reshape(1, 4 * hidden_size)   # (1, 4H)
        params["layers"].append((w_ih_f, w_hh_f, b_f))

    key, k5, k6 = jax.random.split(key, 3)
    fc_bound = 1.0 / jnp.sqrt(jnp.float32(hidden_size))
    w_fc = jax.random.uniform(k5, (out_dim, hidden_size), jnp.float32, -fc_bound, fc_bound)
    b_fc = jax.random.uniform(k6, (out_dim,), jnp.float32, -fc_bound, fc_bound)
    params["fc"] = (w_fc.T, b_fc.reshape(1, out_dim))     # (H, 64), (1, 64)
    return params


@functools.partial(jax.jit, static_argnames=("hidden_size", "num_layers", "out_dim"))
def lstm_branch_forward(x, params_flat, hidden_size, num_layers, out_dim=64):
    # Mirror `if x.dim() == 2: x = x.unsqueeze(1)` from the PyTorch forward.
    if x.ndim == 2:
        x = x[:, None, :]
    B, T, F = x.shape
    Bp = _round_up(max(B, 1), 8)     # sublane-aligned batch (pad with zero rows)
    Fp = _round_up(F, 8)             # 8-aligned feature dim for the hoisted matmul

    xf = x.astype(jnp.float32)
    xf = jnp.pad(xf, ((0, Bp - B), (0, 0), (0, Fp - F)))
    # Time-major flat layout so timestep t is rows [t*Bp, (t+1)*Bp), Bp = 8.
    x_flat = jnp.transpose(xf, (1, 0, 2)).reshape(T * Bp, Fp)

    # Zero-pad layer-0 input weights to match the padded feature dim.
    params = list(params_flat)
    if params[0].shape[0] < Fp:
        params[0] = jnp.pad(params[0], ((0, Fp - params[0].shape[0]), (0, 0)))

    kernel = _make_lstm_branch_kernel(num_layers, Bp, T, hidden_size, out_dim)
    n_inputs = 1 + 3 * num_layers + 2
    vmem_spec = pl.BlockSpec(memory_space=pltpu.MemorySpace.VMEM)

    out = pl.pallas_call(
        kernel,
        out_shape=jax.ShapeDtypeStruct((Bp, out_dim), jnp.float32),
        in_specs=[vmem_spec] * n_inputs,
        out_specs=vmem_spec,
    )(x_flat, *params)
    return out[:B]


def _flatten_params(params):
    flat = []
    for (w_ih, w_hh, b) in params["layers"]:
        flat.extend([w_ih, w_hh, b])
    flat.extend(list(params["fc"]))
    return tuple(flat)


def _reference_forward(x, params, hidden_size, num_layers):
    """Pure-JAX reference (same fused param layout) for correctness checking."""
    if x.ndim == 2:
        x = x[:, None, :]
    B, T, _ = x.shape
    H = hidden_size
    seq = x.astype(jnp.float32)
    h = jnp.zeros((B, H), jnp.float32)
    for (w_ih, w_hh, b) in params["layers"]:
        h = jnp.zeros((B, H), jnp.float32)
        c = jnp.zeros((B, H), jnp.float32)
        outs = []
        for t in range(T):
            z = seq[:, t, :] @ w_ih + h @ w_hh + b  # (B, 4H)
            i_g = jax.nn.sigmoid(z[:, 0 * H:1 * H])
            f_g = jax.nn.sigmoid(z[:, 1 * H:2 * H])
            g_g = jnp.tanh(z[:, 2 * H:3 * H])
            o_g = jax.nn.sigmoid(z[:, 3 * H:4 * H])
            c = f_g * c + i_g * g_g
            h = o_g * jnp.tanh(c)
            outs.append(h)
        seq = jnp.stack(outs, axis=1)
    w_fc, b_fc = params["fc"]
    return jnp.maximum(h @ w_fc + b_fc, 0.0)


if __name__ == "__main__":
    # Small shapes consistent with the module: input_size=22 (from the file),
    # batch=2, seq=8, hidden=32, num_layers=2, fc out=64.
    INPUT_SIZE = 22
    HIDDEN = 32
    NUM_LAYERS = 2
    B, T = 2, 8

    key = jax.random.PRNGKey(0)
    key, kx = jax.random.split(key)
    x = jax.random.normal(kx, (B, T, INPUT_SIZE), jnp.float32)

    params = init_lstm_branch_params(key, INPUT_SIZE, HIDDEN, NUM_LAYERS, out_dim=64)
    params_flat = _flatten_params(params)

    out = lstm_branch_forward(x, params_flat, HIDDEN, NUM_LAYERS, 64)
    out = jax.block_until_ready(out)

    ref = _reference_forward(x, params, HIDDEN, NUM_LAYERS)
    assert out.shape == (B, 64), out.shape
    assert jnp.allclose(out, ref, atol=2e-4, rtol=1e-4), "mismatch vs JAX reference"

    print("KERNEL_OK")
</pallas_src>

<mosaic_0001>
module attributes {stable_mosaic.version = 11 : i64} {
  func.func @kernel(%arg0: memref<64x24xf32, #tpu.memory_space<vmem>>, %arg1: memref<24x128xf32, #tpu.memory_space<vmem>>, %arg2: memref<32x128xf32, #tpu.memory_space<vmem>>, %arg3: memref<1x128xf32, #tpu.memory_space<vmem>>, %arg4: memref<32x128xf32, #tpu.memory_space<vmem>>, %arg5: memref<32x128xf32, #tpu.memory_space<vmem>>, %arg6: memref<1x128xf32, #tpu.memory_space<vmem>>, %arg7: memref<32x64xf32, #tpu.memory_space<vmem>>, %arg8: memref<1x64xf32, #tpu.memory_space<vmem>>, %arg9: memref<8x64xf32, #tpu.memory_space<vmem>>) attributes {dimension_semantics = [], scalar_prefetch = 0 : i64, scratch_operands = 0 : i64, tpu.core_type = #tpu.core_type<tc>} {
    %c0 = arith.constant 0 : index
    %c0_0 = arith.constant 0 : index
    %0 = vector.load %arg1[%c0, %c0_0] : memref<24x128xf32, #tpu.memory_space<vmem>>, vector<24x128xf32>
    %c0_1 = arith.constant 0 : index
    %c0_2 = arith.constant 0 : index
    %1 = vector.load %arg4[%c0_1, %c0_2] : memref<32x128xf32, #tpu.memory_space<vmem>>, vector<32x128xf32>
    %c0_3 = arith.constant 0 : index
    %c0_4 = arith.constant 0 : index
    %2 = vector.load %arg2[%c0_3, %c0_4] : memref<32x128xf32, #tpu.memory_space<vmem>>, vector<32x128xf32>
    %c0_5 = arith.constant 0 : index
    %c0_6 = arith.constant 0 : index
    %3 = vector.load %arg5[%c0_5, %c0_6] : memref<32x128xf32, #tpu.memory_space<vmem>>, vector<32x128xf32>
    %c0_7 = arith.constant 0 : index
    %c0_8 = arith.constant 0 : index
    %4 = vector.load %arg3[%c0_7, %c0_8] : memref<1x128xf32, #tpu.memory_space<vmem>>, vector<1x128xf32>
    %c0_9 = arith.constant 0 : index
    %c0_10 = arith.constant 0 : index
    %5 = vector.load %arg6[%c0_9, %c0_10] : memref<1x128xf32, #tpu.memory_space<vmem>>, vector<1x128xf32>
    %c0_11 = arith.constant 0 : index
    %c0_12 = arith.constant 0 : index
    %6 = vector.load %arg7[%c0_11, %c0_12] : memref<32x64xf32, #tpu.memory_space<vmem>>, vector<32x64xf32>
    %c0_13 = arith.constant 0 : index
    %c0_14 = arith.constant 0 : index
    %7 = vector.load %arg8[%c0_13, %c0_14] : memref<1x64xf32, #tpu.memory_space<vmem>>, vector<1x64xf32>
    %c0_15 = arith.constant 0 : index
    %c0_16 = arith.constant 0 : index
    %8 = vector.load %arg0[%c0_15, %c0_16] : memref<64x24xf32, #tpu.memory_space<vmem>>, vector<64x24xf32>
    %cst = arith.constant dense<0.000000e+00> : vector<64x128xf32>
    %9 = tpu.matmul %8, %0, %cst {dimension_numbers = #tpu.dot_dimension_numbers<[1], [0], [0], [1], [0, 0, 1, 1], [], []>} : vector<64x24xf32>, vector<24x128xf32>, vector<64x128xf32> -> vector<64x128xf32>
    %10 = vector.broadcast %4 : vector<1x128xf32> to vector<64x128xf32>
    %11 = arith.addf %9, %10 : vector<64x128xf32>
    %12 = vector.shape_cast %11 : vector<64x128xf32> to vector<8x8x128xf32>
    %cst_17 = arith.constant 0.000000e+00 : f32
    %13 = vector.broadcast %cst_17 : f32 to vector<8x32xf32>
    %cst_18 = arith.constant 0.000000e+00 : f32
    %14 = vector.broadcast %cst_18 : f32 to vector<8x32xf32>
    %cst_19 = arith.constant 0.000000e+00 : f32
    %15 = vector.broadcast %cst_19 : f32 to vector<8x32xf32>
    %cst_20 = arith.constant 0.000000e+00 : f32
    %16 = vector.broadcast %cst_20 : f32 to vector<8x32xf32>
    %17 = vector.extract_strided_slice %12 {offsets = [0, 0, 0], sizes = [1, 8, 128], strides = [1, 1, 1]} : vector<8x8x128xf32> to vector<1x8x128xf32>
    %18 = vector.shape_cast %17 : vector<1x8x128xf32> to vector<8x128xf32>
    %cst_21 = arith.constant dense<0.000000e+00> : vector<8x128xf32>
    %19 = tpu.matmul %13, %2, %cst_21 {dimension_numbers = #tpu.dot_dimension_numbers<[1], [0], [0], [1], [0, 0, 1, 1], [], []>} : vector<8x32xf32>, vector<32x128xf32>, vector<8x128xf32> -> vector<8x128xf32>
    %20 = arith.addf %18, %19 : vector<8x128xf32>
    %21 = arith.negf %20 : vector<8x128xf32>
    %22 = math.exp %21 : vector<8x128xf32>
    %cst_22 = arith.constant 1.000000e+00 : f32
    %23 = vector.broadcast %cst_22 : f32 to vector<8x128xf32>
    %24 = arith.addf %23, %22 : vector<8x128xf32>
    %25 = arith.divf %23, %24 : vector<8x128xf32>
    %26 = math.tanh %20 : vector<8x128xf32>
    %27 = vector.extract_strided_slice %25 {offsets = [0, 0], sizes = [8, 32], strides = [1, 1]} : vector<8x128xf32> to vector<8x32xf32>
    %28 = vector.extract_strided_slice %25 {offsets = [0, 32], sizes = [8, 32], strides = [1, 1]} : vector<8x128xf32> to vector<8x32xf32>
    %29 = vector.extract_strided_slice %26 {offsets = [0, 64], sizes = [8, 32], strides = [1, 1]} : vector<8x128xf32> to vector<8x32xf32>
    %30 = vector.extract_strided_slice %25 {offsets = [0, 96], sizes = [8, 32], strides = [1, 1]} : vector<8x128xf32> to vector<8x32xf32>
    %31 = arith.mulf %28, %15 : vector<8x32xf32>
    %32 = arith.mulf %27, %29 : vector<8x32xf32>
    %33 = arith.addf %31, %32 : vector<8x32xf32>
    %34 = math.tanh %33 : vector<8x32xf32>
    %35 = arith.mulf %30, %34 : vector<8x32xf32>
    %cst_23 = arith.constant dense<0.000000e+00> : vector<8x128xf32>
    %36 = tpu.matmul %35, %1, %cst_23 {dimension_numbers = #tpu.dot_dimension_numbers<[1], [0], [0], [1], [0, 0, 1, 1], [], []>} : vector<8x32xf32>, vector<32x128xf32>, vector<8x128xf32> -> vector<8x128xf32>
    %37 = vector.broadcast %5 : vector<1x128xf32> to vector<8x128xf32>
    %38 = arith.addf %36, %37 : vector<8x128xf32>
    %cst_24 = arith.constant dense<0.000000e+00> : vector<8x128xf32>
    %39 = tpu.matmul %14, %3, %cst_24 {dimension_numbers = #tpu.dot_dimension_numbers<[1], [0], [0], [1], [0, 0, 1, 1], [], []>} : vector<8x32xf32>, vector<32x128xf32>, vector<8x128xf32> -> vector<8x128xf32>
    %40 = arith.addf %38, %39 : vector<8x128xf32>
    %41 = arith.negf %40 : vector<8x128xf32>
    %42 = math.exp %41 : vector<8x128xf32>
    %cst_25 = arith.constant 1.000000e+00 : f32
    %43 = vector.broadcast %cst_25 : f32 to vector<8x128xf32>
    %44 = arith.addf %43, %42 : vector<8x128xf32>
    %45 = arith.divf %43, %44 : vector<8x128xf32>
    %46 = math.tanh %40 : vector<8x128xf32>
    %47 = vector.extract_strided_slice %45 {offsets = [0, 0], sizes = [8, 32], strides = [1, 1]} : vector<8x128xf32> to vector<8x32xf32>
    %48 = vector.extract_strided_slice %45 {offsets = [0, 32], sizes = [8, 32], strides = [1, 1]} : vector<8x128xf32> to vector<8x32xf32>
    %49 = vector.extract_strided_slice %46 {offsets = [0, 64], sizes = [8, 32], strides = [1, 1]} : vector<8x128xf32> to vector<8x32xf32>
    %50 = vector.extract_strided_slice %45 {offsets = [0, 96], sizes = [8, 32], strides = [1, 1]} : vector<8x128xf32> to vector<8x32xf32>
    %51 = arith.mulf %48, %16 : vector<8x32xf32>
    %52 = arith.mulf %47, %49 : vector<8x32xf32>
    %53 = arith.addf %51, %52 : vector<8x32xf32>
    %54 = math.tanh %53 : vector<8x32xf32>
    %55 = arith.mulf %50, %54 : vector<8x32xf32>
    %56 = vector.extract_strided_slice %12 {offsets = [1, 0, 0], sizes = [1, 8, 128], strides = [1, 1, 1]} : vector<8x8x128xf32> to vector<1x8x128xf32>
    %57 = vector.shape_cast %56 : vector<1x8x128xf32> to vector<8x128xf32>
    %cst_26 = arith.constant dense<0.000000e+00> : vector<8x128xf32>
    %58 = tpu.matmul %35, %2, %cst_26 {dimension_numbers = #tpu.dot_dimension_numbers<[1], [0], [0], [1], [0, 0, 1, 1], [], []>} : vector<8x32xf32>, vector<32x128xf32>, vector<8x128xf32> -> vector<8x128xf32>
    %59 = arith.addf %57, %58 : vector<8x128xf32>
    %60 = arith.negf %59 : vector<8x128xf32>
    %61 = math.exp %60 : vector<8x128xf32>
    %cst_27 = arith.constant 1.000000e+00 : f32
    %62 = vector.broadcast %cst_27 : f32 to vector<8x128xf32>
    %63 = arith.addf %62, %61 : vector<8x128xf32>
    %64 = arith.divf %62, %63 : vector<8x128xf32>
    %65 = math.tanh %59 : vector<8x128xf32>
    %66 = vector.extract_strided_slice %64 {offsets = [0, 0], sizes = [8, 32], strides = [1, 1]} : vector<8x128xf32> to vector<8x32xf32>
    %67 = vector.extract_strided_slice %64 {offsets = [0, 32], sizes = [8, 32], strides = [1, 1]} : vector<8x128xf32> to vector<8x32xf32>
    %68 = vector.extract_strided_slice %65 {offsets = [0, 64], sizes = [8, 32], strides = [1, 1]} : vector<8x128xf32> to vector<8x32xf32>
    %69 = vector.extract_strided_slice %64 {offsets = [0, 96], sizes = [8, 32], strides = [1, 1]} : vector<8x128xf32> to vector<8x32xf32>
    %70 = arith.mulf %67, %33 : vector<8x32xf32>
    %71 = arith.mulf %66, %68 : vector<8x32xf32>
    %72 = arith.addf %70, %71 : vector<8x32xf32>
    %73 = math.tanh %72 : vector<8x32xf32>
    %74 = arith.mulf %69, %73 : vector<8x32xf32>
    %cst_28 = arith.constant dense<0.000000e+00> : vector<8x128xf32>
    %75 = tpu.matmul %74, %1, %cst_28 {dimension_numbers = #tpu.dot_dimension_numbers<[1], [0], [0], [1], [0, 0, 1, 1], [], []>} : vector<8x32xf32>, vector<32x128xf32>, vector<8x128xf32> -> vector<8x128xf32>
    %76 = vector.broadcast %5 : vector<1x128xf32> to vector<8x128xf32>
    %77 = arith.addf %75, %76 : vector<8x128xf32>
    %cst_29 = arith.constant dense<0.000000e+00> : vector<8x128xf32>
    %78 = tpu.matmul %55, %3, %cst_29 {dimension_numbers = #tpu.dot_dimension_numbers<[1], [0], [0], [1], [0, 0, 1, 1], [], []>} : vector<8x32xf32>, vector<32x128xf32>, vector<8x128xf32> -> vector<8x128xf32>
    %79 = arith.addf %77, %78 : vector<8x128xf32>
    %80 = arith.negf %79 : vector<8x128xf32>
    %81 = math.exp %80 : vector<8x128xf32>
    %cst_30 = arith.constant 1.000000e+00 : f32
    %82 = vector.broadcast %cst_30 : f32 to vector<8x128xf32>
    %83 = arith.addf %82, %81 : vector<8x128xf32>
    %84 = arith.divf %82, %83 : vector<8x128xf32>
    %85 = math.tanh %79 : vector<8x128xf32>
    %86 = vector.extract_strided_slice %84 {offsets = [0, 0], sizes = [8, 32], strides = [1, 1]} : vector<8x128xf32> to vector<8x32xf32>
    %87 = vector.extract_strided_slice %84 {offsets = [0, 32], sizes = [8, 32], strides = [1, 1]} : vector<8x128xf32> to vector<8x32xf32>
    %88 = vector.extract_strided_slice %85 {offsets = [0, 64], sizes = [8, 32], strides = [1, 1]} : vector<8x128xf32> to vector<8x32xf32>
    %89 = vector.extract_strided_slice %84 {offsets = [0, 96], sizes = [8, 32], strides = [1, 1]} : vector<8x128xf32> to vector<8x32xf32>
    %90 = arith.mulf %87, %53 : vector<8x32xf32>
    %91 = arith.mulf %86, %88 : vector<8x32xf32>
    %92 = arith.addf %90, %91 : vector<8x32xf32>
    %93 = math.tanh %92 : vector<8x32xf32>
    %94 = arith.mulf %89, %93 : vector<8x32xf32>
    %95 = vector.extract_strided_slice %12 {offsets = [2, 0, 0], sizes = [1, 8, 128], strides = [1, 1, 1]} : vector<8x8x128xf32> to vector<1x8x128xf32>
    %96 = vector.shape_cast %95 : vector<1x8x128xf32> to vector<8x128xf32>
    %cst_31 = arith.constant dense<0.000000e+00> : vector<8x128xf32>
    %97 = tpu.matmul %74, %2, %cst_31 {dimension_numbers = #tpu.dot_dimension_numbers<[1], [0], [0], [1], [0, 0, 1, 1], [], []>} : vector<8x32xf32>, vector<32x128xf32>, vector<8x128xf32> -> vector<8x128xf32>
    %98 = arith.addf %96, %97 : vector<8x128xf32>
    %99 = arith.negf %98 : vector<8x128xf32>
    %100 = math.exp %99 : vector<8x128xf32>
    %cst_32 = arith.constant 1.000000e+00 : f32
    %101 = vector.broadcast %cst_32 : f32 to vector<8x128xf32>
    %102 = arith.addf %101, %100 : vector<8x128xf32>
    %103 = arith.divf %101, %102 : vector<8x128xf32>
    %104 = math.tanh %98 : vector<8x128xf32>
    %105 = vector.extract_strided_slice %103 {offsets = [0, 0], sizes = [8, 32], strides = [1, 1]} : vector<8x128xf32> to vector<8x32xf32>
    %106 = vector.extract_strided_slice %103 {offsets = [0, 32], sizes = [8, 32], strides = [1, 1]} : vector<8x128xf32> to vector<8x32xf32>
    %107 = vector.extract_strided_slice %104 {offsets = [0, 64], sizes = [8, 32], strides = [1, 1]} : vector<8x128xf32> to vector<8x32xf32>
    %108 = vector.extract_strided_slice %103 {offsets = [0, 96], sizes = [8, 32], strides = [1, 1]} : vector<8x128xf32> to vector<8x32xf32>
    %109 = arith.mulf %106, %72 : vector<8x32xf32>
    %110 = arith.mulf %105, %107 : vector<8x32xf32>
    %111 = arith.addf %109, %110 : vector<8x32xf32>
    %112 = math.tanh %111 : vector<8x32xf32>
    %113 = arith.mulf %108, %112 : vector<8x32xf32>
    %cst_33 = arith.constant dense<0.000000e+00> : vector<8x128xf32>
    %114 = tpu.matmul %113, %1, %cst_33 {dimension_numbers = #tpu.dot_dimension_numbers<[1], [0], [0], [1], [0, 0, 1, 1], [], []>} : vector<8x32xf32>, vector<32x128xf32>, vector<8x128xf32> -> vector<8x128xf32>
    %115 = vector.broadcast %5 : vector<1x128xf32> to vector<8x128xf32>
    %116 = arith.addf %114, %115 : vector<8x128xf32>
    %cst_34 = arith.constant dense<0.000000e+00> : vector<8x128xf32>
    %117 = tpu.matmul %94, %3, %cst_34 {dimension_numbers = #tpu.dot_dimension_numbers<[1], [0], [0], [1], [0, 0, 1, 1], [], []>} : vector<8x32xf32>, vector<32x128xf32>, vector<8x128xf32> -> vector<8x128xf32>
    %118 = arith.addf %116, %117 : vector<8x128xf32>
    %119 = arith.negf %118 : vector<8x128xf32>
    %120 = math.exp %119 : vector<8x128xf32>
    %cst_35 = arith.constant 1.000000e+00 : f32
    %121 = vector.broadcast %cst_35 : f32 to vector<8x128xf32>
    %122 = arith.addf %121, %120 : vector<8x128xf32>
    %123 = arith.divf %121, %122 : vector<8x128xf32>
    %124 = math.tanh %118 : vector<8x128xf32>
    %125 = vector.extract_strided_slice %123 {offsets = [0, 0], sizes = [8, 32], strides = [1, 1]} : vector<8x128xf32> to vector<8x32xf32>
    %126 = vector.extract_strided_slice %123 {offsets = [0, 32], sizes = [8, 32], strides = [1, 1]} : vector<8x128xf32> to vector<8x32xf32>
    %127 = vector.extract_strided_slice %124 {offsets = [0, 64], sizes = [8, 32], strides = [1, 1]} : vector<8x128xf32> to vector<8x32xf32>
    %128 = vector.extract_strided_slice %123 {offsets = [0, 96], sizes = [8, 32], strides = [1, 1]} : vector<8x128xf32> to vector<8x32xf32>
    %129 = arith.mulf %126, %92 : vector<8x32xf32>
    %130 = arith.mulf %125, %127 : vector<8x32xf32>
    %131 = arith.addf %129, %130 : vector<8x32xf32>
    %132 = math.tanh %131 : vector<8x32xf32>
    %133 = arith.mulf %128, %132 : vector<8x32xf32>
    %134 = vector.extract_strided_slice %12 {offsets = [3, 0, 0], sizes = [1, 8, 128], strides = [1, 1, 1]} : vector<8x8x128xf32> to vector<1x8x128xf32>
    %135 = vector.shape_cast %134 : vector<1x8x128xf32> to vector<8x128xf32>
    %cst_36 = arith.constant dense<0.000000e+00> : vector<8x128xf32>
    %136 = tpu.matmul %113, %2, %cst_36 {dimension_numbers = #tpu.dot_dimension_numbers<[1], [0], [0], [1], [0, 0, 1, 1], [], []>} : vector<8x32xf32>, vector<32x128xf32>, vector<8x128xf32> -> vector<8x128xf32>
    %137 = arith.addf %135, %136 : vector<8x128xf32>
    %138 = arith.negf %137 : vector<8x128xf32>
    %139 = math.exp %138 : vector<8x128xf32>
    %cst_37 = arith.constant 1.000000e+00 : f32
    %140 = vector.broadcast %cst_37 : f32 to vector<8x128xf32>
    %141 = arith.addf %140, %139 : vector<8x128xf32>
    %142 = arith.divf %140, %141 : vector<8x128xf32>
    %143 = math.tanh %137 : vector<8x128xf32>
    %144 = vector.extract_strided_slice %142 {offsets = [0, 0], sizes = [8, 32], strides = [1, 1]} : vector<8x128xf32> to vector<8x32xf32>
    %145 = vector.extract_strided_slice %142 {offsets = [0, 32], sizes = [8, 32], strides = [1, 1]} : vector<8x128xf32> to vector<8x32xf32>
    %146 = vector.extract_strided_slice %143 {offsets = [0, 64], sizes = [8, 32], strides = [1, 1]} : vector<8x128xf32> to vector<8x32xf32>
    %147 = vector.extract_strided_slice %142 {offsets = [0, 96], sizes = [8, 32], strides = [1, 1]} : vector<8x128xf32> to vector<8x32xf32>
    %148 = arith.mulf %145, %111 : vector<8x32xf32>
    %149 = arith.mulf %144, %146 : vector<8x32xf32>
    %150 = arith.addf %148, %149 : vector<8x32xf32>
    %151 = math.tanh %150 : vector<8x32xf32>
    %152 = arith.mulf %147, %151 : vector<8x32xf32>
    %cst_38 = arith.constant dense<0.000000e+00> : vector<8x128xf32>
    %153 = tpu.matmul %152, %1, %cst_38 {dimension_numbers = #tpu.dot_dimension_numbers<[1], [0], [0], [1], [0, 0, 1, 1], [], []>} : vector<8x32xf32>, vector<32x128xf32>, vector<8x128xf32> -> vector<8x128xf32>
    %154 = vector.broadcast %5 : vector<1x128xf32> to vector<8x128xf32>
    %155 = arith.addf %153, %154 : vector<8x128xf32>
    %cst_39 = arith.constant dense<0.000000e+00> : vector<8x128xf32>
    %156 = tpu.matmul %133, %3, %cst_39 {dimension_numbers = #tpu.dot_dimension_numbers<[1], [0], [0], [1], [0, 0, 1, 1], [], []>} : vector<8x32xf32>, vector<32x128xf32>, vector<8x128xf32> -> vector<8x128xf32>
    %157 = arith.addf %155, %156 : vector<8x128xf32>
    %158 = arith.negf %157 : vector<8x128xf32>
    %159 = math.exp %158 : vector<8x128xf32>
    %cst_40 = arith.constant 1.000000e+00 : f32
    %160 = vector.broadcast %cst_40 : f32 to vector<8x128xf32>
    %161 = arith.addf %160, %159 : vector<8x128xf32>
    %162 = arith.divf %160, %161 : vector<8x128xf32>
    %163 = math.tanh %157 : vector<8x128xf32>
    %164 = vector.extract_strided_slice %162 {offsets = [0, 0], sizes = [8, 32], strides = [1, 1]} : vector<8x128xf32> to vector<8x32xf32>
    %165 = vector.extract_strided_slice %162 {offsets = [0, 32], sizes = [8, 32], strides = [1, 1]} : vector<8x128xf32> to vector<8x32xf32>
    %166 = vector.extract_strided_slice %163 {offsets = [0, 64], sizes = [8, 32], strides = [1, 1]} : vector<8x128xf32> to vector<8x32xf32>
    %167 = vector.extract_strided_slice %162 {offsets = [0, 96], sizes = [8, 32], strides = [1, 1]} : vector<8x128xf32> to vector<8x32xf32>
    %168 = arith.mulf %165, %131 : vector<8x32xf32>
    %169 = arith.mulf %164, %166 : vector<8x32xf32>
    %170 = arith.addf %168, %169 : vector<8x32xf32>
    %171 = math.tanh %170 : vector<8x32xf32>
    %172 = arith.mulf %167, %171 : vector<8x32xf32>
    %173 = vector.extract_strided_slice %12 {offsets = [4, 0, 0], sizes = [1, 8, 128], strides = [1, 1, 1]} : vector<8x8x128xf32> to vector<1x8x128xf32>
    %174 = vector.shape_cast %173 : vector<1x8x128xf32> to vector<8x128xf32>
    %cst_41 = arith.constant dense<0.000000e+00> : vector<8x128xf32>
    %175 = tpu.matmul %152, %2, %cst_41 {dimension_numbers = #tpu.dot_dimension_numbers<[1], [0], [0], [1], [0, 0, 1, 1], [], []>} : vector<8x32xf32>, vector<32x128xf32>, vector<8x128xf32> -> vector<8x128xf32>
    %176 = arith.addf %174, %175 : vector<8x128xf32>
    %177 = arith.negf %176 : vector<8x128xf32>
    %178 = math.exp %177 : vector<8x128xf32>
    %cst_42 = arith.constant 1.000000e+00 : f32
    %179 = vector.broadcast %cst_42 : f32 to vector<8x128xf32>
    %180 = arith.addf %179, %178 : vector<8x128xf32>
    %181 = arith.divf %179, %180 : vector<8x128xf32>
    %182 = math.tanh %176 : vector<8x128xf32>
    %183 = vector.extract_strided_slice %181 {offsets = [0, 0], sizes = [8, 32], strides = [1, 1]} : vector<8x128xf32> to vector<8x32xf32>
    %184 = vector.extract_strided_slice %181 {offsets = [0, 32], sizes = [8, 32], strides = [1, 1]} : vector<8x128xf32> to vector<8x32xf32>
    %185 = vector.extract_strided_slice %182 {offsets = [0, 64], sizes = [8, 32], strides = [1, 1]} : vector<8x128xf32> to vector<8x32xf32>
    %186 = vector.extract_strided_slice %181 {offsets = [0, 96], sizes = [8, 32], strides = [1, 1]} : vector<8x128xf32> to vector<8x32xf32>
    %187 = arith.mulf %184, %150 : vector<8x32xf32>
    %188 = arith.mulf %183, %185 : vector<8x32xf32>
    %189 = arith.addf %187, %188 : vector<8x32xf32>
    %190 = math.tanh %189 : vector<8x32xf32>
    %191 = arith.mulf %186, %190 : vector<8x32xf32>
    %cst_43 = arith.constant dense<0.000000e+00> : vector<8x128xf32>
    %192 = tpu.matmul %191, %1, %cst_43 {dimension_numbers = #tpu.dot_dimension_numbers<[1], [0], [0], [1], [0, 0, 1, 1], [], []>} : vector<8x32xf32>, vector<32x128xf32>, vector<8x128xf32> -> vector<8x128xf32>
    %193 = vector.broadcast %5 : vector<1x128xf32> to vector<8x128xf32>
    %194 = arith.addf %192, %193 : vector<8x128xf32>
    %cst_44 = arith.constant dense<0.000000e+00> : vector<8x128xf32>
    %195 = tpu.matmul %172, %3, %cst_44 {dimension_numbers = #tpu.dot_dimension_numbers<[1], [0], [0], [1], [0, 0, 1, 1], [], []>} : vector<8x32xf32>, vector<32x128xf32>, vector<8x128xf32> -> vector<8x128xf32>
    %196 = arith.addf %194, %195 : vector<8x128xf32>
    %197 = arith.negf %196 : vector<8x128xf32>
    %198 = math.exp %197 : vector<8x128xf32>
    %cst_45 = arith.constant 1.000000e+00 : f32
    %199 = vector.broadcast %cst_45 : f32 to vector<8x128xf32>
    %200 = arith.addf %199, %198 : vector<8x128xf32>
    %201 = arith.divf %199, %200 : vector<8x128xf32>
    %202 = math.tanh %196 : vector<8x128xf32>
    %203 = vector.extract_strided_slice %201 {offsets = [0, 0], sizes = [8, 32], strides = [1, 1]} : vector<8x128xf32> to vector<8x32xf32>
    %204 = vector.extract_strided_slice %201 {offsets = [0, 32], sizes = [8, 32], strides = [1, 1]} : vector<8x128xf32> to vector<8x32xf32>
    %205 = vector.extract_strided_slice %202 {offsets = [0, 64], sizes = [8, 32], strides = [1, 1]} : vector<8x128xf32> to vector<8x32xf32>
    %206 = vector.extract_strided_slice %201 {offsets = [0, 96], sizes = [8, 32], strides = [1, 1]} : vector<8x128xf32> to vector<8x32xf32>
    %207 = arith.mulf %204, %170 : vector<8x32xf32>
    %208 = arith.mulf %203, %205 : vector<8x32xf32>
    %209 = arith.addf %207, %208 : vector<8x32xf32>
    %210 = math.tanh %209 : vector<8x32xf32>
    %211 = arith.mulf %206, %210 : vector<8x32xf32>
    %212 = vector.extract_strided_slice %12 {offsets = [5, 0, 0], sizes = [1, 8, 128], strides = [1, 1, 1]} : vector<8x8x128xf32> to vector<1x8x128xf32>
    %213 = vector.shape_cast %212 : vector<1x8x128xf32> to vector<8x128xf32>
    %cst_46 = arith.constant dense<0.000000e+00> : vector<8x128xf32>
    %214 = tpu.matmul %191, %2, %cst_46 {dimension_numbers = #tpu.dot_dimension_numbers<[1], [0], [0], [1], [0, 0, 1, 1], [], []>} : vector<8x32xf32>, vector<32x128xf32>, vector<8x128xf32> -> vector<8x128xf32>
    %215 = arith.addf %213, %214 : vector<8x128xf32>
    %216 = arith.negf %215 : vector<8x128xf32>
    %217 = math.exp %216 : vector<8x128xf32>
    %cst_47 = arith.constant 1.000000e+00 : f32
    %218 = vector.broadcast %cst_47 : f32 to vector<8x128xf32>
    %219 = arith.addf %218, %217 : vector<8x128xf32>
    %220 = arith.divf %218, %219 : vector<8x128xf32>
    %221 = math.tanh %215 : vector<8x128xf32>
    %222 = vector.extract_strided_slice %220 {offsets = [0, 0], sizes = [8, 32], strides = [1, 1]} : vector<8x128xf32> to vector<8x32xf32>
    %223 = vector.extract_strided_slice %220 {offsets = [0, 32], sizes = [8, 32], strides = [1, 1]} : vector<8x128xf32> to vector<8x32xf32>
    %224 = vector.extract_strided_slice %221 {offsets = [0, 64], sizes = [8, 32], strides = [1, 1]} : vector<8x128xf32> to vector<8x32xf32>
    %225 = vector.extract_strided_slice %220 {offsets = [0, 96], sizes = [8, 32], strides = [1, 1]} : vector<8x128xf32> to vector<8x32xf32>
    %226 = arith.mulf %223, %189 : vector<8x32xf32>
    %227 = arith.mulf %222, %224 : vector<8x32xf32>
    %228 = arith.addf %226, %227 : vector<8x32xf32>
    %229 = math.tanh %228 : vector<8x32xf32>
    %230 = arith.mulf %225, %229 : vector<8x32xf32>
    %cst_48 = arith.constant dense<0.000000e+00> : vector<8x128xf32>
    %231 = tpu.matmul %230, %1, %cst_48 {dimension_numbers = #tpu.dot_dimension_numbers<[1], [0], [0], [1], [0, 0, 1, 1], [], []>} : vector<8x32xf32>, vector<32x128xf32>, vector<8x128xf32> -> vector<8x128xf32>
    %232 = vector.broadcast %5 : vector<1x128xf32> to vector<8x128xf32>
    %233 = arith.addf %231, %232 : vector<8x128xf32>
    %cst_49 = arith.constant dense<0.000000e+00> : vector<8x128xf32>
    %234 = tpu.matmul %211, %3, %cst_49 {dimension_numbers = #tpu.dot_dimension_numbers<[1], [0], [0], [1], [0, 0, 1, 1], [], []>} : vector<8x32xf32>, vector<32x128xf32>, vector<8x128xf32> -> vector<8x128xf32>
    %235 = arith.addf %233, %234 : vector<8x128xf32>
    %236 = arith.negf %235 : vector<8x128xf32>
    %237 = math.exp %236 : vector<8x128xf32>
    %cst_50 = arith.constant 1.000000e+00 : f32
    %238 = vector.broadcast %cst_50 : f32 to vector<8x128xf32>
    %239 = arith.addf %238, %237 : vector<8x128xf32>
    %240 = arith.divf %238, %239 : vector<8x128xf32>
    %241 = math.tanh %235 : vector<8x128xf32>
    %242 = vector.extract_strided_slice %240 {offsets = [0, 0], sizes = [8, 32], strides = [1, 1]} : vector<8x128xf32> to vector<8x32xf32>
    %243 = vector.extract_strided_slice %240 {offsets = [0, 32], sizes = [8, 32], strides = [1, 1]} : vector<8x128xf32> to vector<8x32xf32>
    %244 = vector.extract_strided_slice %241 {offsets = [0, 64], sizes = [8, 32], strides = [1, 1]} : vector<8x128xf32> to vector<8x32xf32>
    %245 = vector.extract_strided_slice %240 {offsets = [0, 96], sizes = [8, 32], strides = [1, 1]} : vector<8x128xf32> to vector<8x32xf32>
    %246 = arith.mulf %243, %209 : vector<8x32xf32>
    %247 = arith.mulf %242, %244 : vector<8x32xf32>
    %248 = arith.addf %246, %247 : vector<8x32xf32>
    %249 = math.tanh %248 : vector<8x32xf32>
    %250 = arith.mulf %245, %249 : vector<8x32xf32>
    %251 = vector.extract_strided_slice %12 {offsets = [6, 0, 0], sizes = [1, 8, 128], strides = [1, 1, 1]} : vector<8x8x128xf32> to vector<1x8x128xf32>
    %252 = vector.shape_cast %251 : vector<1x8x128xf32> to vector<8x128xf32>
    %cst_51 = arith.constant dense<0.000000e+00> : vector<8x128xf32>
    %253 = tpu.matmul %230, %2, %cst_51 {dimension_numbers = #tpu.dot_dimension_numbers<[1], [0], [0], [1], [0, 0, 1, 1], [], []>} : vector<8x32xf32>, vector<32x128xf32>, vector<8x128xf32> -> vector<8x128xf32>
    %254 = arith.addf %252, %253 : vector<8x128xf32>
    %255 = arith.negf %254 : vector<8x128xf32>
    %256 = math.exp %255 : vector<8x128xf32>
    %cst_52 = arith.constant 1.000000e+00 : f32
    %257 = vector.broadcast %cst_52 : f32 to vector<8x128xf32>
    %258 = arith.addf %257, %256 : vector<8x128xf32>
    %259 = arith.divf %257, %258 : vector<8x128xf32>
    %260 = math.tanh %254 : vector<8x128xf32>
    %261 = vector.extract_strided_slice %259 {offsets = [0, 0], sizes = [8, 32], strides = [1, 1]} : vector<8x128xf32> to vector<8x32xf32>
    %262 = vector.extract_strided_slice %259 {offsets = [0, 32], sizes = [8, 32], strides = [1, 1]} : vector<8x128xf32> to vector<8x32xf32>
    %263 = vector.extract_strided_slice %260 {offsets = [0, 64], sizes = [8, 32], strides = [1, 1]} : vector<8x128xf32> to vector<8x32xf32>
    %264 = vector.extract_strided_slice %259 {offsets = [0, 96], sizes = [8, 32], strides = [1, 1]} : vector<8x128xf32> to vector<8x32xf32>
    %265 = arith.mulf %262, %228 : vector<8x32xf32>
    %266 = arith.mulf %261, %263 : vector<8x32xf32>
    %267 = arith.addf %265, %266 : vector<8x32xf32>
    %268 = math.tanh %267 : vector<8x32xf32>
    %269 = arith.mulf %264, %268 : vector<8x32xf32>
    %cst_53 = arith.constant dense<0.000000e+00> : vector<8x128xf32>
    %270 = tpu.matmul %269, %1, %cst_53 {dimension_numbers = #tpu.dot_dimension_numbers<[1], [0], [0], [1], [0, 0, 1, 1], [], []>} : vector<8x32xf32>, vector<32x128xf32>, vector<8x128xf32> -> vector<8x128xf32>
    %271 = vector.broadcast %5 : vector<1x128xf32> to vector<8x128xf32>
    %272 = arith.addf %270, %271 : vector<8x128xf32>
    %cst_54 = arith.constant dense<0.000000e+00> : vector<8x128xf32>
    %273 = tpu.matmul %250, %3, %cst_54 {dimension_numbers = #tpu.dot_dimension_numbers<[1], [0], [0], [1], [0, 0, 1, 1], [], []>} : vector<8x32xf32>, vector<32x128xf32>, vector<8x128xf32> -> vector<8x128xf32>
    %274 = arith.addf %272, %273 : vector<8x128xf32>
    %275 = arith.negf %274 : vector<8x128xf32>
    %276 = math.exp %275 : vector<8x128xf32>
    %cst_55 = arith.constant 1.000000e+00 : f32
    %277 = vector.broadcast %cst_55 : f32 to vector<8x128xf32>
    %278 = arith.addf %277, %276 : vector<8x128xf32>
    %279 = arith.divf %277, %278 : vector<8x128xf32>
    %280 = math.tanh %274 : vector<8x128xf32>
    %281 = vector.extract_strided_slice %279 {offsets = [0, 0], sizes = [8, 32], strides = [1, 1]} : vector<8x128xf32> to vector<8x32xf32>
    %282 = vector.extract_strided_slice %279 {offsets = [0, 32], sizes = [8, 32], strides = [1, 1]} : vector<8x128xf32> to vector<8x32xf32>
    %283 = vector.extract_strided_slice %280 {offsets = [0, 64], sizes = [8, 32], strides = [1, 1]} : vector<8x128xf32> to vector<8x32xf32>
    %284 = vector.extract_strided_slice %279 {offsets = [0, 96], sizes = [8, 32], strides = [1, 1]} : vector<8x128xf32> to vector<8x32xf32>
    %285 = arith.mulf %282, %248 : vector<8x32xf32>
    %286 = arith.mulf %281, %283 : vector<8x32xf32>
    %287 = arith.addf %285, %286 : vector<8x32xf32>
    %288 = math.tanh %287 : vector<8x32xf32>
    %289 = arith.mulf %284, %288 : vector<8x32xf32>
    %290 = vector.extract_strided_slice %12 {offsets = [7, 0, 0], sizes = [1, 8, 128], strides = [1, 1, 1]} : vector<8x8x128xf32> to vector<1x8x128xf32>
    %291 = vector.shape_cast %290 : vector<1x8x128xf32> to vector<8x128xf32>
    %cst_56 = arith.constant dense<0.000000e+00> : vector<8x128xf32>
    %292 = tpu.matmul %269, %2, %cst_56 {dimension_numbers = #tpu.dot_dimension_numbers<[1], [0], [0], [1], [0, 0, 1, 1], [], []>} : vector<8x32xf32>, vector<32x128xf32>, vector<8x128xf32> -> vector<8x128xf32>
    %293 = arith.addf %291, %292 : vector<8x128xf32>
    %294 = arith.negf %293 : vector<8x128xf32>
    %295 = math.exp %294 : vector<8x128xf32>
    %cst_57 = arith.constant 1.000000e+00 : f32
    %296 = vector.broadcast %cst_57 : f32 to vector<8x128xf32>
    %297 = arith.addf %296, %295 : vector<8x128xf32>
    %298 = arith.divf %296, %297 : vector<8x128xf32>
    %299 = math.tanh %293 : vector<8x128xf32>
    %300 = vector.extract_strided_slice %298 {offsets = [0, 0], sizes = [8, 32], strides = [1, 1]} : vector<8x128xf32> to vector<8x32xf32>
    %301 = vector.extract_strided_slice %298 {offsets = [0, 32], sizes = [8, 32], strides = [1, 1]} : vector<8x128xf32> to vector<8x32xf32>
    %302 = vector.extract_strided_slice %299 {offsets = [0, 64], sizes = [8, 32], strides = [1, 1]} : vector<8x128xf32> to vector<8x32xf32>
    %303 = vector.extract_strided_slice %298 {offsets = [0, 96], sizes = [8, 32], strides = [1, 1]} : vector<8x128xf32> to vector<8x32xf32>
    %304 = arith.mulf %301, %267 : vector<8x32xf32>
    %305 = arith.mulf %300, %302 : vector<8x32xf32>
    %306 = arith.addf %304, %305 : vector<8x32xf32>
    %307 = math.tanh %306 : vector<8x32xf32>
    %308 = arith.mulf %303, %307 : vector<8x32xf32>
    %cst_58 = arith.constant dense<0.000000e+00> : vector<8x128xf32>
    %309 = tpu.matmul %308, %1, %cst_58 {dimension_numbers = #tpu.dot_dimension_numbers<[1], [0], [0], [1], [0, 0, 1, 1], [], []>} : vector<8x32xf32>, vector<32x128xf32>, vector<8x128xf32> -> vector<8x128xf32>
    %310 = vector.broadcast %5 : vector<1x128xf32> to vector<8x128xf32>
    %311 = arith.addf %309, %310 : vector<8x128xf32>
    %cst_59 = arith.constant dense<0.000000e+00> : vector<8x128xf32>
    %312 = tpu.matmul %289, %3, %cst_59 {dimension_numbers = #tpu.dot_dimension_numbers<[1], [0], [0], [1], [0, 0, 1, 1], [], []>} : vector<8x32xf32>, vector<32x128xf32>, vector<8x128xf32> -> vector<8x128xf32>
    %313 = arith.addf %311, %312 : vector<8x128xf32>
    %314 = arith.negf %313 : vector<8x128xf32>
    %315 = math.exp %314 : vector<8x128xf32>
    %cst_60 = arith.constant 1.000000e+00 : f32
    %316 = vector.broadcast %cst_60 : f32 to vector<8x128xf32>
    %317 = arith.addf %316, %315 : vector<8x128xf32>
    %318 = arith.divf %316, %317 : vector<8x128xf32>
    %319 = math.tanh %313 : vector<8x128xf32>
    %320 = vector.extract_strided_slice %318 {offsets = [0, 0], sizes = [8, 32], strides = [1, 1]} : vector<8x128xf32> to vector<8x32xf32>
    %321 = vector.extract_strided_slice %318 {offsets = [0, 32], sizes = [8, 32], strides = [1, 1]} : vector<8x128xf32> to vector<8x32xf32>
    %322 = vector.extract_strided_slice %319 {offsets = [0, 64], sizes = [8, 32], strides = [1, 1]} : vector<8x128xf32> to vector<8x32xf32>
    %323 = vector.extract_strided_slice %318 {offsets = [0, 96], sizes = [8, 32], strides = [1, 1]} : vector<8x128xf32> to vector<8x32xf32>
    %324 = arith.mulf %321, %287 : vector<8x32xf32>
    %325 = arith.mulf %320, %322 : vector<8x32xf32>
    %326 = arith.addf %324, %325 : vector<8x32xf32>
    %327 = math.tanh %326 : vector<8x32xf32>
    %328 = arith.mulf %323, %327 : vector<8x32xf32>
    %cst_61 = arith.constant dense<0.000000e+00> : vector<8x64xf32>
    %329 = tpu.matmul %328, %6, %cst_61 {dimension_numbers = #tpu.dot_dimension_numbers<[1], [0], [0], [1], [0, 0, 1, 1], [], []>} : vector<8x32xf32>, vector<32x64xf32>, vector<8x64xf32> -> vector<8x64xf32>
    %330 = vector.broadcast %7 : vector<1x64xf32> to vector<8x64xf32>
    %331 = arith.addf %329, %330 : vector<8x64xf32>
    %cst_62 = arith.constant 0.000000e+00 : f32
    %332 = vector.broadcast %cst_62 : f32 to vector<8x64xf32>
    %333 = arith.maximumf %331, %332 : vector<8x64xf32>
    %c0_63 = arith.constant 0 : index
    %c0_64 = arith.constant 0 : index
    %334 = vector.load %arg9[%c0_63, %c0_64] : memref<8x64xf32, #tpu.memory_space<vmem>>, vector<8x64xf32>
    tpu.vector_store %arg9[%c0_63, %c0_64], %333 {strides = array<i32>} : memref<8x64xf32, #tpu.memory_space<vmem>>, vector<8x64xf32>,
    return
  }
}

</mosaic_0001>

<llo_original>
// kernel: lstm_branch_forward.1
$region0: #{lstm_branch_forward.1}
  #allocation0 [shape = 'u32[]', space=smem, size = 0x4, offset = 0x4, fixed_abs, tag = 'smem constant byte address 0x4 - core index']
  #allocation1 [shape = 'u32[144,128]{1,0:T(1,128)}', space=vmem, size = 0x12000, scoped, tag = 'internal scratch']
  %s0 = inlined_call_operand.vmem [shape: f32[64,24], index: 0, kind: input, shape index: {}]
  %s1 = inlined_call_operand.vmem [shape: f32[24,128], index: 1, kind: input, shape index: {}]
  %s2 = inlined_call_operand.vmem [shape: f32[32,128], index: 2, kind: input, shape index: {}]
  %s3 = inlined_call_operand.vmem [shape: f32[1,128], index: 3, kind: input, shape index: {}]
  %s4 = inlined_call_operand.vmem [shape: f32[32,128], index: 4, kind: input, shape index: {}]
  %s5 = inlined_call_operand.vmem [shape: f32[32,128], index: 5, kind: input, shape index: {}]
  %s6 = inlined_call_operand.vmem [shape: f32[1,128], index: 6, kind: input, shape index: {}]
  %s7 = inlined_call_operand.vmem [shape: f32[32,64], index: 7, kind: input, shape index: {}]
  %s8 = inlined_call_operand.vmem [shape: f32[1,64], index: 8, kind: input, shape index: {}]
  %s9 = inlined_call_operand.vmem [shape: f32[8,64], index: 9, kind: output, shape index: {}]
  %s10 = sld [smem:[#allocation0]]
  $region46: #{lstm_branch_forward.1} parent=0
    _
  %s12 = ssub.s32 1, %s10
  %s13 = scalar_select 0, %s12, %s10
  // Predicated region
  $region2: #{lstm_branch_forward.1} parent=0 // pred_check
    _
  $region3: #{lstm_branch_forward.1} parent=0 // pred_check_branch
    %15 = sbr.rel (0) target = $region5
  $region4: #{lstm_branch_forward.1} parent=0 // pred_region
    _
  $region5: #{lstm_branch_forward.1} parent=0 // pred_fallthru
    _
  // Predicated region
  $region6: #{lstm_branch_forward.1} parent=0 // pred_check
    _
  $region7: #{lstm_branch_forward.1} parent=0 // pred_check_branch
    %17 = sbr.rel (0) target = $region9
  $region8: #{lstm_branch_forward.1} parent=0 // pred_region
    _
  $region9: #{lstm_branch_forward.1} parent=0 // pred_fallthru
    _
  // Predicated region
  $region10: #{lstm_branch_forward.1} parent=0 // pred_check
    _
  $region11: #{lstm_branch_forward.1} parent=0 // pred_check_branch
    %19 = sbr.rel (0) target = $region13
  $region12: #{lstm_branch_forward.1} parent=0 // pred_region
    _
  $region13: #{lstm_branch_forward.1} parent=0 // pred_fallthru
    _
  // Predicated region
  $region14: #{lstm_branch_forward.1} parent=0 // pred_check
    _
  $region15: #{lstm_branch_forward.1} parent=0 // pred_check_branch
    %21 = sbr.rel (0) target = $region17
  $region16: #{lstm_branch_forward.1} parent=0 // pred_region
    _
  $region17: #{lstm_branch_forward.1} parent=0 // pred_fallthru
    _
  // Predicated region
  $region18: #{lstm_branch_forward.1} parent=0 // pred_check
    _
  $region19: #{lstm_branch_forward.1} parent=0 // pred_check_branch
    %23 = sbr.rel (0) target = $region21
  $region20: #{lstm_branch_forward.1} parent=0 // pred_region
    _
  $region21: #{lstm_branch_forward.1} parent=0 // pred_fallthru
    _
  // Predicated region
  $region22: #{lstm_branch_forward.1} parent=0 // pred_check
    _
  $region23: #{lstm_branch_forward.1} parent=0 // pred_check_branch
    %25 = sbr.rel (0) target = $region25
  $region24: #{lstm_branch_forward.1} parent=0 // pred_region
    _
  $region25: #{lstm_branch_forward.1} parent=0 // pred_fallthru
    _
  // Predicated region
  $region26: #{lstm_branch_forward.1} parent=0 // pred_check
    _
  $region27: #{lstm_branch_forward.1} parent=0 // pred_check_branch
    %27 = sbr.rel (0) target = $region29
  $region28: #{lstm_branch_forward.1} parent=0 // pred_region
    _
  $region29: #{lstm_branch_forward.1} parent=0 // pred_fallthru
    _
  // Predicated region
  $region30: #{lstm_branch_forward.1} parent=0 // pred_check
    _
  $region31: #{lstm_branch_forward.1} parent=0 // pred_check_branch
    %29 = sbr.rel (0) target = $region33
  $region32: #{lstm_branch_forward.1} parent=0 // pred_region
    _
  $region33: #{lstm_branch_forward.1} parent=0 // pred_fallthru
    _
  // Predicated region
  $region34: #{lstm_branch_forward.1} parent=0 // pred_check
    _
  $region35: #{lstm_branch_forward.1} parent=0 // pred_check_branch
    %31 = sbr.rel (0) target = $region37
  $region36: #{lstm_branch_forward.1} parent=0 // pred_region
    _
  $region37: #{lstm_branch_forward.1} parent=0 // pred_fallthru
    _
  %v32 = vld [vmem:[%s1] sm:$0xff]
  %v33 = vld [vmem:[%s1 + $0x8] sm:$0xff]
  %v34 = vld [vmem:[%s1 + $0x10] sm:$0xff]
  %v35 = vld [vmem:[%s4] sm:$0xff]
  %v36 = vld [vmem:[%s4 + $0x8] sm:$0xff]
  %v37 = vld [vmem:[%s4 + $0x10] sm:$0xff]
  %v38 = vld [vmem:[%s4 + $0x18] sm:$0xff]
  %v39 = vld [vmem:[%s2] sm:$0xff]
  %v40 = vld [vmem:[%s2 + $0x8] sm:$0xff]
  %v41 = vld [vmem:[%s2 + $0x10] sm:$0xff]
  %v42 = vld [vmem:[%s2 + $0x18] sm:$0xff]
  %v43 = vld [vmem:[%s5] sm:$0xff]
  %v44 = vld [vmem:[%s5 + $0x8] sm:$0xff]
  %v45 = vld [vmem:[%s5 + $0x10] sm:$0xff]
  %v46 = vld [vmem:[%s5 + $0x18] sm:$0xff]
  %v47 = vld [vmem:[%s3] sm:$0x1]
  %v48 = vld [vmem:[%s6] sm:$0x1]
  %v49 = vld [vmem:[%s7] sm:$0xff]
  %v50 = vld [vmem:[%s7 + $0x8] sm:$0xff]
  %v51 = vld [vmem:[%s7 + $0x10] sm:$0xff]
  %v52 = vld [vmem:[%s7 + $0x18] sm:$0xff]
  %v53 = vld [vmem:[%s8] sm:$0x1]
  %v54 = vld [vmem:[%s0] sm:$0xff]
  %v55 = vld [vmem:[%s0 + $0x8] sm:$0xff]
  %v56 = vld [vmem:[%s0 + $0x10] sm:$0xff]
  %v57 = vld [vmem:[%s0 + $0x18] sm:$0xff]
  %v58 = vld [vmem:[%s0 + $0x20] sm:$0xff]
  %v59 = vld [vmem:[%s0 + $0x28] sm:$0xff]
  %v60 = vld [vmem:[%s0 + $0x30] sm:$0xff]
  %v61 = vld [vmem:[%s0 + $0x38] sm:$0xff]
  %v63 = vlaneseq
  %v64 = vshrl.u32 %v63, 7
  %v65 = vsub.s32 0, %v64
  %v66 = vrot.slane %v47, %v65
  %vm68 = vcmask 195584
  %v70 = vsel %vm68, %v54, 0
  %v73 = vsel %vm68, %v55, 0
  %v76 = vsel %vm68, %v56, 0
  %v79 = vsel %vm68, %v57, 0
  %v82 = vsel %vm68, %v58, 0
  %v85 = vsel %vm68, %v59, 0
  %v88 = vsel %vm68, %v60, 0
  %v91 = vsel %vm68, %v61, 0
  %93 = vmatprep.subr.mxu0 0.0
  %94 = vmatpush1.msra.mxu0 0.0
  %95 = vmatprep.subr.mxu0 0.0
  %96 = vmatpush1.msra.mxu0 0.0
  %97 = vmatprep.subr.mxu0 0.0
  %98 = vmatpush1.msra.mxu0 0.0
  %99 = vmatprep.subr.mxu0 0.0
  %100 = vmatpush1.msra.mxu0 0.0
  %101 = vmatprep.subr.mxu0 0.0
  %102 = vmatpush1.msra.mxu0 0.0
  %103 = vmatprep.subr.mxu0 0.0
  %104 = vmatpush1.msra.mxu0 0.0
  %105 = vmatprep.subr.mxu0 0.0
  %106 = vmatpush1.msra.mxu0 0.0
  %107 = vmatprep.subr.mxu0 0.0
  %108 = vmatpush1.msra.mxu0 0.0
  %109 = vmatprep.subr.mxu0 0.0
  %110 = vmatpush1.msra.mxu0 0.0
  %111 = vmatprep.subr.mxu0 0.0
  %112 = vmatpush1.msra.mxu0 0.0
  %113 = vmatprep.subr.mxu0 0.0
  %114 = vmatpush1.msra.mxu0 0.0
  %115 = vmatprep.subr.mxu0 0.0
  %116 = vmatpush1.msra.mxu0 0.0
  %117 = vmatprep.subr.mxu0 0.0
  %118 = vmatpush1.msra.mxu0 0.0
  %119 = vmatprep.subr.mxu0 0.0
  %120 = vmatpush1.msra.mxu0 %v34
  %121 = vmatprep.subr.mxu0 0.0
  %122 = vmatpush1.msra.mxu0 %v33
  %123 = vmatprep.subr.mxu0 0.0
  %124 = vmatpush1.msra.mxu0 %v32
  %125 = vmatprep.subr.mxu0 0.0
  %126 = vmatpush2.msra.mxu0 0.0
  %127 = vmatprep.subr.mxu0 0.0
  %128 = vmatpush2.msra.mxu0 0.0
  %129 = vmatprep.subr.mxu0 0.0
  %130 = vmatpush2.msra.mxu0 0.0
  %131 = vmatprep.subr.mxu0 0.0
  %132 = vmatpush2.msra.mxu0 0.0
  %133 = vmatprep.subr.mxu0 0.0
  %134 = vmatpush2.msra.mxu0 0.0
  %135 = vmatprep.subr.mxu0 0.0
  %136 = vmatpush2.msra.mxu0 0.0
  %137 = vmatprep.subr.mxu0 0.0
  %138 = vmatpush2.msra.mxu0 0.0
  %139 = vmatprep.subr.mxu0 0.0
  %140 = vmatpush2.msra.mxu0 0.0
  %141 = vmatprep.subr.mxu0 0.0
  %142 = vmatpush2.msra.mxu0 0.0
  %143 = vmatprep.subr.mxu0 0.0
  %144 = vmatpush2.msra.mxu0 0.0
  %145 = vmatprep.subr.mxu0 0.0
  %146 = vmatpush2.msra.mxu0 0.0
  %147 = vmatprep.subr.mxu0 0.0
  %148 = vmatpush2.msra.mxu0 0.0
  %149 = vmatprep.subr.mxu0 0.0
  %150 = vmatpush2.msra.mxu0 0.0
  %151 = vmatprep.subr.mxu0 0.0
  %152 = vmatpush2.msra.mxu0 0.0
  %153 = vmatprep.subr.mxu0 0.0
  %154 = vmatpush2.msra.mxu0 0.0
  %155 = vmatprep.subr.mxu0 0.0
  %156 = vmatpush2.msra.mxu0 0.0
  %157 = vmatprep.mubr.f32.mxu0 0.0
  %158 = vmatmul.mubr.f32.gmra.mxu0 %v70
  %v159 = vpop.f32.mrf.mxu0
  %v160 = vadd.f32 %v66, %v159
  %v161 = vpop.f32.mrf.mxu0
  %162 = vmatprep.mubr.f32.mxu0 0.0
  %163 = vmatmul.mubr.f32.gmra.mxu0 %v73
  %v164 = vpop.f32.mrf.mxu0
  %v165 = vadd.f32 %v66, %v164
  %v166 = vpop.f32.mrf.mxu0
  %167 = vmatprep.mubr.f32.mxu0 0.0
  %168 = vmatmul.mubr.f32.gmra.mxu0 %v76
  %v169 = vpop.f32.mrf.mxu0
  %v170 = vadd.f32 %v66, %v169
  %v171 = vpop.f32.mrf.mxu0
  %172 = vmatprep.mubr.f32.mxu0 0.0
  %173 = vmatmul.mubr.f32.gmra.mxu0 %v79
  %v174 = vpop.f32.mrf.mxu0
  %v175 = vadd.f32 %v66, %v174
  %v176 = vpop.f32.mrf.mxu0
  %177 = vmatprep.mubr.f32.mxu0 0.0
  %178 = vmatmul.mubr.f32.gmra.mxu0 %v82
  %v179 = vpop.f32.mrf.mxu0
  %v180 = vadd.f32 %v66, %v179
  %v181 = vpop.f32.mrf.mxu0
  %182 = vmatprep.mubr.f32.mxu0 0.0
  %183 = vmatmul.mubr.f32.gmra.mxu0 %v85
  %v184 = vpop.f32.mrf.mxu0
  %v185 = vadd.f32 %v66, %v184
  %v186 = vpop.f32.mrf.mxu0
  %187 = vmatprep.mubr.f32.mxu0 0.0
  %188 = vmatmul.mubr.f32.gmra.mxu0 %v88
  %v189 = vpop.f32.mrf.mxu0
  %v190 = vadd.f32 %v66, %v189
  %v191 = vpop.f32.mrf.mxu0
  %192 = vmatprep.mubr.f32.mxu0 0.0
  %193 = vmatmul.mubr.f32.gmra.mxu0 %v91
  %v194 = vpop.f32.mrf.mxu0
  %v195 = vadd.f32 %v66, %v194
  %v196 = vpop.f32.mrf.mxu0
  %197 = vdwg.mxu0
  %vm198 = vcmask 261120
  %v200 = vsel %vm198, 0.0, 0
  %202 = vmatprep.subr.mxu0 0.0
  %203 = vmatpush1.msra.mxu0 0.0
  %204 = vmatprep.subr.mxu0 0.0
  %205 = vmatpush1.msra.mxu0 0.0
  %206 = vmatprep.subr.mxu0 0.0
  %207 = vmatpush1.msra.mxu0 0.0
  %208 = vmatprep.subr.mxu0 0.0
  %209 = vmatpush1.msra.mxu0 0.0
  %210 = vmatprep.subr.mxu0 0.0
  %211 = vmatpush1.msra.mxu0 0.0
  %212 = vmatprep.subr.mxu0 0.0
  %213 = vmatpush1.msra.mxu0 0.0
  %214 = vmatprep.subr.mxu0 0.0
  %215 = vmatpush1.msra.mxu0 0.0
  %216 = vmatprep.subr.mxu0 0.0
  %217 = vmatpush1.msra.mxu0 0.0
  %218 = vmatprep.subr.mxu0 0.0
  %219 = vmatpush1.msra.mxu0 0.0
  %220 = vmatprep.subr.mxu0 0.0
  %221 = vmatpush1.msra.mxu0 0.0
  %222 = vmatprep.subr.mxu0 0.0
  %223 = vmatpush1.msra.mxu0 0.0
  %224 = vmatprep.subr.mxu0 0.0
  %225 = vmatpush1.msra.mxu0 0.0
  %226 = vmatprep.subr.mxu0 0.0
  %227 = vmatpush1.msra.mxu0 %v42
  %228 = vmatprep.subr.mxu0 0.0
  %229 = vmatpush1.msra.mxu0 %v41
  %230 = vmatprep.subr.mxu0 0.0
  %231 = vmatpush1.msra.mxu0 %v40
  %232 = vmatprep.subr.mxu0 0.0
  %233 = vmatpush1.msra.mxu0 %v39
  %234 = vmatprep.subr.mxu0 0.0
  %235 = vmatpush2.msra.mxu0 0.0
  %236 = vmatprep.subr.mxu0 0.0
  %237 = vmatpush2.msra.mxu0 0.0
  %238 = vmatprep.subr.mxu0 0.0
  %239 = vmatpush2.msra.mxu0 0.0
  %240 = vmatprep.subr.mxu0 0.0
  %241 = vmatpush2.msra.mxu0 0.0
  %242 = vmatprep.subr.mxu0 0.0
  %243 = vmatpush2.msra.mxu0 0.0
  %244 = vmatprep.subr.mxu0 0.0
  %245 = vmatpush2.msra.mxu0 0.0
  %246 = vmatprep.subr.mxu0 0.0
  %247 = vmatpush2.msra.mxu0 0.0
  %248 = vmatprep.subr.mxu0 0.0
  %249 = vmatpush2.msra.mxu0 0.0
  %250 = vmatprep.subr.mxu0 0.0
  %251 = vmatpush2.msra.mxu0 0.0
  %252 = vmatprep.subr.mxu0 0.0
  %253 = vmatpush2.msra.mxu0 0.0
  %254 = vmatprep.subr.mxu0 0.0
  %255 = vmatpush2.msra.mxu0 0.0
  %256 = vmatprep.subr.mxu0 0.0
  %257 = vmatpush2.msra.mxu0 0.0
  %258 = vmatprep.subr.mxu0 0.0
  %259 = vmatpush2.msra.mxu0 0.0
  %260 = vmatprep.subr.mxu0 0.0
  %261 = vmatpush2.msra.mxu0 0.0
  %262 = vmatprep.subr.mxu0 0.0
  %263 = vmatpush2.msra.mxu0 0.0
  %264 = vmatprep.subr.mxu0 0.0
  %265 = vmatpush2.msra.mxu0 0.0
  %266 = vmatprep.mubr.f32.mxu0 0.0
  %267 = vmatmul.mubr.f32.gmra.mxu0 %v200
  %v268 = vpop.f32.mrf.mxu0
  %v269 = vadd.f32 0.0, %v268
  %v270 = vpop.f32.mrf.mxu0
  %271 = vdwg.mxu0
  %v272 = vadd.f32 %v160, %v269
  %v273 = vxor.u32 %v272, 2147483648
  %v274 = vmul.f32 %v273, 1.442695
  %v275 = vpow.pop %v274
  %v276 = vadd.f32 %v275, 1.0
  %v277 = vrcp.pop %v276
  %v278 = vmul.f32 1.0, %v277
  %v279 = vtanh.pop %v272
  %v280 = vmul.f32 %v278, 0.0
  %282 = vrot.lane.b32.xlu0 %v279, 64
  %v283 = vpop.permute.xlu0 %282
  %v285 = vmul.f32 %v278, %v283
  %287 = vrot.lane.b32.xlu0 %v285, 32
  %v288 = vpop.permute.xlu0 %287
  %v290 = vadd.f32 %v280, %v288
  %v291 = vtanh.pop %v290
  %293 = vrot.lane.b32.xlu0 %v291, 64
  %v294 = vpop.permute.xlu0 %293
  %v296 = vmul.f32 %v278, %v294
  %v298 = vlaneseq
  %v299 = vshrl.u32 %v298, 7
  %v300 = vsub.s32 0, %v299
  %v301 = vrot.slane %v48, %v300
  %304 = vrot.lane.b32.xlu0 %v296, 32
  %v305 = vpop.permute.xlu0 %304
  %v306 = vsel %vm198, %v305, 0
  %308 = vmatprep.subr.mxu0 0.0
  %309 = vmatpush1.msra.mxu0 0.0
  %310 = vmatprep.subr.mxu0 0.0
  %311 = vmatpush1.msra.mxu0 0.0
  %312 = vmatprep.subr.mxu0 0.0
  %313 = vmatpush1.msra.mxu0 0.0
  %314 = vmatprep.subr.mxu0 0.0
  %315 = vmatpush1.msra.mxu0 0.0
  %316 = vmatprep.subr.mxu0 0.0
  %317 = vmatpush1.msra.mxu0 0.0
  %318 = vmatprep.subr.mxu0 0.0
  %319 = vmatpush1.msra.mxu0 0.0
  %320 = vmatprep.subr.mxu0 0.0
  %321 = vmatpush1.msra.mxu0 0.0
  %322 = vmatprep.subr.mxu0 0.0
  %323 = vmatpush1.msra.mxu0 0.0
  %324 = vmatprep.subr.mxu0 0.0
  %325 = vmatpush1.msra.mxu0 0.0
  %326 = vmatprep.subr.mxu0 0.0
  %327 = vmatpush1.msra.mxu0 0.0
  %328 = vmatprep.subr.mxu0 0.0
  %329 = vmatpush1.msra.mxu0 0.0
  %330 = vmatprep.subr.mxu0 0.0
  %331 = vmatpush1.msra.mxu0 0.0
  %332 = vmatprep.subr.mxu0 0.0
  %333 = vmatpush1.msra.mxu0 %v38
  %334 = vmatprep.subr.mxu0 0.0
  %335 = vmatpush1.msra.mxu0 %v37
  %336 = vmatprep.subr.mxu0 0.0
  %337 = vmatpush1.msra.mxu0 %v36
  %338 = vmatprep.subr.mxu0 0.0
  %339 = vmatpush1.msra.mxu0 %v35
  %340 = vmatprep.subr.mxu0 0.0
  %341 = vmatpush2.msra.mxu0 0.0
  %342 = vmatprep.subr.mxu0 0.0
  %343 = vmatpush2.msra.mxu0 0.0
  %344 = vmatprep.subr.mxu0 0.0
  %345 = vmatpush2.msra.mxu0 0.0
  %346 = vmatprep.subr.mxu0 0.0
  %347 = vmatpush2.msra.mxu0 0.0
  %348 = vmatprep.subr.mxu0 0.0
  %349 = vmatpush2.msra.mxu0 0.0
  %350 = vmatprep.subr.mxu0 0.0
  %351 = vmatpush2.msra.mxu0 0.0
  %352 = vmatprep.subr.mxu0 0.0
  %353 = vmatpush2.msra.mxu0 0.0
  %354 = vmatprep.subr.mxu0 0.0
  %355 = vmatpush2.msra.mxu0 0.0
  %356 = vmatprep.subr.mxu0 0.0
  %357 = vmatpush2.msra.mxu0 0.0
  %358 = vmatprep.subr.mxu0 0.0
  %359 = vmatpush2.msra.mxu0 0.0
  %360 = vmatprep.subr.mxu0 0.0
  %361 = vmatpush2.msra.mxu0 0.0
  %362 = vmatprep.subr.mxu0 0.0
  %363 = vmatpush2.msra.mxu0 0.0
  %364 = vmatprep.subr.mxu0 0.0
  %365 = vmatpush2.msra.mxu0 0.0
  %366 = vmatprep.subr.mxu0 0.0
  %367 = vmatpush2.msra.mxu0 0.0
  %368 = vmatprep.subr.mxu0 0.0
  %369 = vmatpush2.msra.mxu0 0.0
  %370 = vmatprep.subr.mxu0 0.0
  %371 = vmatpush2.msra.mxu0 0.0
  %372 = vmatprep.mubr.f32.mxu0 0.0
  %373 = vmatmul.mubr.f32.gmra.mxu0 %v306
  %v374 = vpop.f32.mrf.mxu0
  %v375 = vadd.f32 %v301, %v374
  %v376 = vpop.f32.mrf.mxu0
  %377 = vdwg.mxu0
  %378 = vmatprep.subr.mxu0 0.0
  %379 = vmatpush1.msra.mxu0 0.0
  %380 = vmatprep.subr.mxu0 0.0
  %381 = vmatpush1.msra.mxu0 0.0
  %382 = vmatprep.subr.mxu0 0.0
  %383 = vmatpush1.msra.mxu0 0.0
  %384 = vmatprep.subr.mxu0 0.0
  %385 = vmatpush1.msra.mxu0 0.0
  %386 = vmatprep.subr.mxu0 0.0
  %387 = vmatpush1.msra.mxu0 0.0
  %388 = vmatprep.subr.mxu0 0.0
  %389 = vmatpush1.msra.mxu0 0.0
  %390 = vmatprep.subr.mxu0 0.0
  %391 = vmatpush1.msra.mxu0 0.0
  %392 = vmatprep.subr.mxu0 0.0
  %393 = vmatpush1.msra.mxu0 0.0
  %394 = vmatprep.subr.mxu0 0.0
  %395 = vmatpush1.msra.mxu0 0.0
  %396 = vmatprep.subr.mxu0 0.0
  %397 = vmatpush1.msra.mxu0 0.0
  %398 = vmatprep.subr.mxu0 0.0
  %399 = vmatpush1.msra.mxu0 0.0
  %400 = vmatprep.subr.mxu0 0.0
  %401 = vmatpush1.msra.mxu0 0.0
  %402 = vmatprep.subr.mxu0 0.0
  %403 = vmatpush1.msra.mxu0 %v46
  %404 = vmatprep.subr.mxu0 0.0
  %405 = vmatpush1.msra.mxu0 %v45
  %406 = vmatprep.subr.mxu0 0.0
  %407 = vmatpush1.msra.mxu0 %v44
  %408 = vmatprep.subr.mxu0 0.0
  %409 = vmatpush1.msra.mxu0 %v43
  %410 = vmatprep.subr.mxu0 0.0
  %411 = vmatpush2.msra.mxu0 0.0
  %412 = vmatprep.subr.mxu0 0.0
  %413 = vmatpush2.msra.mxu0 0.0
  %414 = vmatprep.subr.mxu0 0.0
  %415 = vmatpush2.msra.mxu0 0.0
  %416 = vmatprep.subr.mxu0 0.0
  %417 = vmatpush2.msra.mxu0 0.0
  %418 = vmatprep.subr.mxu0 0.0
  %419 = vmatpush2.msra.mxu0 0.0
  %420 = vmatprep.subr.mxu0 0.0
  %421 = vmatpush2.msra.mxu0 0.0
  %422 = vmatprep.subr.mxu0 0.0
  %423 = vmatpush2.msra.mxu0 0.0
  %424 = vmatprep.subr.mxu0 0.0
  %425 = vmatpush2.msra.mxu0 0.0
  %426 = vmatprep.subr.mxu0 0.0
  %427 = vmatpush2.msra.mxu0 0.0
  %428 = vmatprep.subr.mxu0 0.0
  %429 = vmatpush2.msra.mxu0 0.0
  %430 = vmatprep.subr.mxu0 0.0
  %431 = vmatpush2.msra.mxu0 0.0
  %432 = vmatprep.subr.mxu0 0.0
  %433 = vmatpush2.msra.mxu0 0.0
  %434 = vmatprep.subr.mxu0 0.0
  %435 = vmatpush2.msra.mxu0 0.0
  %436 = vmatprep.subr.mxu0 0.0
  %437 = vmatpush2.msra.mxu0 0.0
  %438 = vmatprep.subr.mxu0 0.0
  %439 = vmatpush2.msra.mxu0 0.0
  %440 = vmatprep.subr.mxu0 0.0
  %441 = vmatpush2.msra.mxu0 0.0
  %442 = vmatprep.mubr.f32.mxu0 0.0
  %443 = vmatmul.mubr.f32.gmra.mxu0 %v200
  %v444 = vpop.f32.mrf.mxu0
  %v445 = vadd.f32 0.0, %v444
  %v446 = vpop.f32.mrf.mxu0
  %447 = vdwg.mxu0
  %v448 = vadd.f32 %v375, %v445
  %v449 = vxor.u32 %v448, 2147483648
  %v450 = vmul.f32 %v449, 1.442695
  %v451 = vpow.pop %v450
  %v452 = vadd.f32 %v451, 1.0
  %v453 = vrcp.pop %v452
  %v454 = vmul.f32 1.0, %v453
  %v455 = vtanh.pop %v448
  %v456 = vmul.f32 %v454, 0.0
  %458 = vrot.lane.b32.xlu0 %v455, 64
  %v459 = vpop.permute.xlu0 %458
  %v461 = vmul.f32 %v454, %v459
  %463 = vrot.lane.b32.xlu0 %v461, 32
  %v464 = vpop.permute.xlu0 %463
  %v466 = vadd.f32 %v456, %v464
  %v467 = vtanh.pop %v466
  %469 = vrot.lane.b32.xlu0 %v467, 64
  %v470 = vpop.permute.xlu0 %469
  %v472 = vmul.f32 %v454, %v470
  %473 = vmatprep.subr.mxu0 0.0
  %474 = vmatpush1.msra.mxu0 0.0
  %475 = vmatprep.subr.mxu0 0.0
  %476 = vmatpush1.msra.mxu0 0.0
  %477 = vmatprep.subr.mxu0 0.0
  %478 = vmatpush1.msra.mxu0 0.0
  %479 = vmatprep.subr.mxu0 0.0
  %480 = vmatpush1.msra.mxu0 0.0
  %481 = vmatprep.subr.mxu0 0.0
  %482 = vmatpush1.msra.mxu0 0.0
  %483 = vmatprep.subr.mxu0 0.0
  %484 = vmatpush1.msra.mxu0 0.0
  %485 = vmatprep.subr.mxu0 0.0
  %486 = vmatpush1.msra.mxu0 0.0
  %487 = vmatprep.subr.mxu0 0.0
  %488 = vmatpush1.msra.mxu0 0.0
  %489 = vmatprep.subr.mxu0 0.0
  %490 = vmatpush1.msra.mxu0 0.0
  %491 = vmatprep.subr.mxu0 0.0
  %492 = vmatpush1.msra.mxu0 0.0
  %493 = vmatprep.subr.mxu0 0.0
  %494 = vmatpush1.msra.mxu0 0.0
  %495 = vmatprep.subr.mxu0 0.0
  %496 = vmatpush1.msra.mxu0 0.0
  %497 = vmatprep.subr.mxu0 0.0
  %498 = vmatpush1.msra.mxu0 %v42
  %499 = vmatprep.subr.mxu0 0.0
  %500 = vmatpush1.msra.mxu0 %v41
  %501 = vmatprep.subr.mxu0 0.0
  %502 = vmatpush1.msra.mxu0 %v40
  %503 = vmatprep.subr.mxu0 0.0
  %504 = vmatpush1.msra.mxu0 %v39
  %505 = vmatprep.subr.mxu0 0.0
  %506 = vmatpush2.msra.mxu0 0.0
  %507 = vmatprep.subr.mxu0 0.0
  %508 = vmatpush2.msra.mxu0 0.0
  %509 = vmatprep.subr.mxu0 0.0
  %510 = vmatpush2.msra.mxu0 0.0
  %511 = vmatprep.subr.mxu0 0.0
  %512 = vmatpush2.msra.mxu0 0.0
  %513 = vmatprep.subr.mxu0 0.0
  %514 = vmatpush2.msra.mxu0 0.0
  %515 = vmatprep.subr.mxu0 0.0
  %516 = vmatpush2.msra.mxu0 0.0
  %517 = vmatprep.subr.mxu0 0.0
  %518 = vmatpush2.msra.mxu0 0.0
  %519 = vmatprep.subr.mxu0 0.0
  %520 = vmatpush2.msra.mxu0 0.0
  %521 = vmatprep.subr.mxu0 0.0
  %522 = vmatpush2.msra.mxu0 0.0
  %523 = vmatprep.subr.mxu0 0.0
  %524 = vmatpush2.msra.mxu0 0.0
  %525 = vmatprep.subr.mxu0 0.0
  %526 = vmatpush2.msra.mxu0 0.0
  %527 = vmatprep.subr.mxu0 0.0
  %528 = vmatpush2.msra.mxu0 0.0
  %529 = vmatprep.subr.mxu0 0.0
  %530 = vmatpush2.msra.mxu0 0.0
  %531 = vmatprep.subr.mxu0 0.0
  %532 = vmatpush2.msra.mxu0 0.0
  %533 = vmatprep.subr.mxu0 0.0
  %534 = vmatpush2.msra.mxu0 0.0
  %535 = vmatprep.subr.mxu0 0.0
  %536 = vmatpush2.msra.mxu0 0.0
  %537 = vmatprep.mubr.f32.mxu0 0.0
  %538 = vmatmul.mubr.f32.gmra.mxu0 %v306
  %v539 = vpop.f32.mrf.mxu0
  %v540 = vadd.f32 0.0, %v539
  %v541 = vpop.f32.mrf.mxu0
  %542 = vdwg.mxu0
  %v543 = vadd.f32 %v165, %v540
  %v544 = vxor.u32 %v543, 2147483648
  %v545 = vmul.f32 %v544, 1.442695
  %v546 = vpow.pop %v545
  %v547 = vadd.f32 %v546, 1.0
  %v548 = vrcp.pop %v547
  %v549 = vmul.f32 1.0, %v548
  %v550 = vtanh.pop %v543
  %v551 = vmul.f32 %v549, %v290
  %553 = vrot.lane.b32.xlu0 %v550, 64
  %v554 = vpop.permute.xlu0 %553
  %v556 = vmul.f32 %v549, %v554
  %558 = vrot.lane.b32.xlu0 %v556, 32
  %v559 = vpop.permute.xlu0 %558
  %v561 = vadd.f32 %v551, %v559
  %v562 = vtanh.pop %v561
  %564 = vrot.lane.b32.xlu0 %v562, 64
  %v565 = vpop.permute.xlu0 %564
  %v567 = vmul.f32 %v549, %v565
  %569 = vrot.lane.b32.xlu0 %v567, 32
  %v570 = vpop.permute.xlu0 %569
  %v571 = vsel %vm198, %v570, 0
  %573 = vmatprep.subr.mxu0 0.0
  %574 = vmatpush1.msra.mxu0 0.0
  %575 = vmatprep.subr.mxu0 0.0
  %576 = vmatpush1.msra.mxu0 0.0
  %577 = vmatprep.subr.mxu0 0.0
  %578 = vmatpush1.msra.mxu0 0.0
  %579 = vmatprep.subr.mxu0 0.0
  %580 = vmatpush1.msra.mxu0 0.0
  %581 = vmatprep.subr.mxu0 0.0
  %582 = vmatpush1.msra.mxu0 0.0
  %583 = vmatprep.subr.mxu0 0.0
  %584 = vmatpush1.msra.mxu0 0.0
  %585 = vmatprep.subr.mxu0 0.0
  %586 = vmatpush1.msra.mxu0 0.0
  %587 = vmatprep.subr.mxu0 0.0
  %588 = vmatpush1.msra.mxu0 0.0
  %589 = vmatprep.subr.mxu0 0.0
  %590 = vmatpush1.msra.mxu0 0.0
  %591 = vmatprep.subr.mxu0 0.0
  %592 = vmatpush1.msra.mxu0 0.0
  %593 = vmatprep.subr.mxu0 0.0
  %594 = vmatpush1.msra.mxu0 0.0
  %595 = vmatprep.subr.mxu0 0.0
  %596 = vmatpush1.msra.mxu0 0.0
  %597 = vmatprep.subr.mxu0 0.0
  %598 = vmatpush1.msra.mxu0 %v38
  %599 = vmatprep.subr.mxu0 0.0
  %600 = vmatpush1.msra.mxu0 %v37
  %601 = vmatprep.subr.mxu0 0.0
  %602 = vmatpush1.msra.mxu0 %v36
  %603 = vmatprep.subr.mxu0 0.0
  %604 = vmatpush1.msra.mxu0 %v35
  %605 = vmatprep.subr.mxu0 0.0
  %606 = vmatpush2.msra.mxu0 0.0
  %607 = vmatprep.subr.mxu0 0.0
  %608 = vmatpush2.msra.mxu0 0.0
  %609 = vmatprep.subr.mxu0 0.0
  %610 = vmatpush2.msra.mxu0 0.0
  %611 = vmatprep.subr.mxu0 0.0
  %612 = vmatpush2.msra.mxu0 0.0
  %613 = vmatprep.subr.mxu0 0.0
  %614 = vmatpush2.msra.mxu0 0.0
  %615 = vmatprep.subr.mxu0 0.0
  %616 = vmatpush2.msra.mxu0 0.0
  %617 = vmatprep.subr.mxu0 0.0
  %618 = vmatpush2.msra.mxu0 0.0
  %619 = vmatprep.subr.mxu0 0.0
  %620 = vmatpush2.msra.mxu0 0.0
  %621 = vmatprep.subr.mxu0 0.0
  %622 = vmatpush2.msra.mxu0 0.0
  %623 = vmatprep.subr.mxu0 0.0
  %624 = vmatpush2.msra.mxu0 0.0
  %625 = vmatprep.subr.mxu0 0.0
  %626 = vmatpush2.msra.mxu0 0.0
  %627 = vmatprep.subr.mxu0 0.0
  %628 = vmatpush2.msra.mxu0 0.0
  %629 = vmatprep.subr.mxu0 0.0
  %630 = vmatpush2.msra.mxu0 0.0
  %631 = vmatprep.subr.mxu0 0.0
  %632 = vmatpush2.msra.mxu0 0.0
  %633 = vmatprep.subr.mxu0 0.0
  %634 = vmatpush2.msra.mxu0 0.0
  %635 = vmatprep.subr.mxu0 0.0
  %636 = vmatpush2.msra.mxu0 0.0
  %637 = vmatprep.mubr.f32.mxu0 0.0
  %638 = vmatmul.mubr.f32.gmra.mxu0 %v571
  %v639 = vpop.f32.mrf.mxu0
  %v640 = vadd.f32 %v301, %v639
  %v641 = vpop.f32.mrf.mxu0
  %642 = vdwg.mxu0
  %644 = vrot.lane.b32.xlu0 %v472, 32
  %v645 = vpop.permute.xlu0 %644
  %v646 = vsel %vm198, %v645, 0
  %648 = vmatprep.subr.mxu0 0.0
  %649 = vmatpush1.msra.mxu0 0.0
  %650 = vmatprep.subr.mxu0 0.0
  %651 = vmatpush1.msra.mxu0 0.0
  %652 = vmatprep.subr.mxu0 0.0
  %653 = vmatpush1.msra.mxu0 0.0
  %654 = vmatprep.subr.mxu0 0.0
  %655 = vmatpush1.msra.mxu0 0.0
  %656 = vmatprep.subr.mxu0 0.0
  %657 = vmatpush1.msra.mxu0 0.0
  %658 = vmatprep.subr.mxu0 0.0
  %659 = vmatpush1.msra.mxu0 0.0
  %660 = vmatprep.subr.mxu0 0.0
  %661 = vmatpush1.msra.mxu0 0.0
  %662 = vmatprep.subr.mxu0 0.0
  %663 = vmatpush1.msra.mxu0 0.0
  %664 = vmatprep.subr.mxu0 0.0
  %665 = vmatpush1.msra.mxu0 0.0
  %666 = vmatprep.subr.mxu0 0.0
  %667 = vmatpush1.msra.mxu0 0.0
  %668 = vmatprep.subr.mxu0 0.0
  %669 = vmatpush1.msra.mxu0 0.0
  %670 = vmatprep.subr.mxu0 0.0
  %671 = vmatpush1.msra.mxu0 0.0
  %672 = vmatprep.subr.mxu0 0.0
  %673 = vmatpush1.msra.mxu0 %v46
  %674 = vmatprep.subr.mxu0 0.0
  %675 = vmatpush1.msra.mxu0 %v45
  %676 = vmatprep.subr.mxu0 0.0
  %677 = vmatpush1.msra.mxu0 %v44
  %678 = vmatprep.subr.mxu0 0.0
  %679 = vmatpush1.msra.mxu0 %v43
  %680 = vmatprep.subr.mxu0 0.0
  %681 = vmatpush2.msra.mxu0 0.0
  %682 = vmatprep.subr.mxu0 0.0
  %683 = vmatpush2.msra.mxu0 0.0
  %684 = vmatprep.subr.mxu0 0.0
  %685 = vmatpush2.msra.mxu0 0.0
  %686 = vmatprep.subr.mxu0 0.0
  %687 = vmatpush2.msra.mxu0 0.0
  %688 = vmatprep.subr.mxu0 0.0
  %689 = vmatpush2.msra.mxu0 0.0
  %690 = vmatprep.subr.mxu0 0.0
  %691 = vmatpush2.msra.mxu0 0.0
  %692 = vmatprep.subr.mxu0 0.0
  %693 = vmatpush2.msra.mxu0 0.0
  %694 = vmatprep.subr.mxu0 0.0
  %695 = vmatpush2.msra.mxu0 0.0
  %696 = vmatprep.subr.mxu0 0.0
  %697 = vmatpush2.msra.mxu0 0.0
  %698 = vmatprep.subr.mxu0 0.0
  %699 = vmatpush2.msra.mxu0 0.0
  %700 = vmatprep.subr.mxu0 0.0
  %701 = vmatpush2.msra.mxu0 0.0
  %702 = vmatprep.subr.mxu0 0.0
  %703 = vmatpush2.msra.mxu0 0.0
  %704 = vmatprep.subr.mxu0 0.0
  %705 = vmatpush2.msra.mxu0 0.0
  %706 = vmatprep.subr.mxu0 0.0
  %707 = vmatpush2.msra.mxu0 0.0
  %708 = vmatprep.subr.mxu0 0.0
  %709 = vmatpush2.msra.mxu0 0.0
  %710 = vmatprep.subr.mxu0 0.0
  %711 = vmatpush2.msra.mxu0 0.0
  %712 = vmatprep.mubr.f32.mxu0 0.0
  %713 = vmatmul.mubr.f32.gmra.mxu0 %v646
  %v714 = vpop.f32.mrf.mxu0
  %v715 = vadd.f32 0.0, %v714
  %v716 = vpop.f32.mrf.mxu0
  %717 = vdwg.mxu0
  %v718 = vadd.f32 %v640, %v715
  %v719 = vxor.u32 %v718, 2147483648
  %v720 = vmul.f32 %v719, 1.442695
  %v721 = vpow.pop %v720
  %v722 = vadd.f32 %v721, 1.0
  %v723 = vrcp.pop %v722
  %v724 = vmul.f32 1.0, %v723
  %v725 = vtanh.pop %v718
  %v726 = vmul.f32 %v724, %v466
  %728 = vrot.lane.b32.xlu0 %v725, 64
  %v729 = vpop.permute.xlu0 %728
  %v731 = vmul.f32 %v724, %v729
  %733 = vrot.lane.b32.xlu0 %v731, 32
  %v734 = vpop.permute.xlu0 %733
  %v736 = vadd.f32 %v726, %v734
  %v737 = vtanh.pop %v736
  %739 = vrot.lane.b32.xlu0 %v737, 64
  %v740 = vpop.permute.xlu0 %739
  %v742 = vmul.f32 %v724, %v740
  %743 = vmatprep.subr.mxu0 0.0
  %744 = vmatpush1.msra.mxu0 0.0
  %745 = vmatprep.subr.mxu0 0.0
  %746 = vmatpush1.msra.mxu0 0.0
  %747 = vmatprep.subr.mxu0 0.0
  %748 = vmatpush1.msra.mxu0 0.0
  %749 = vmatprep.subr.mxu0 0.0
  %750 = vmatpush1.msra.mxu0 0.0
  %751 = vmatprep.subr.mxu0 0.0
  %752 = vmatpush1.msra.mxu0 0.0
  %753 = vmatprep.subr.mxu0 0.0
  %754 = vmatpush1.msra.mxu0 0.0
  %755 = vmatprep.subr.mxu0 0.0
  %756 = vmatpush1.msra.mxu0 0.0
  %757 = vmatprep.subr.mxu0 0.0
  %758 = vmatpush1.msra.mxu0 0.0
  %759 = vmatprep.subr.mxu0 0.0
  %760 = vmatpush1.msra.mxu0 0.0
  %761 = vmatprep.subr.mxu0 0.0
  %762 = vmatpush1.msra.mxu0 0.0
  %763 = vmatprep.subr.mxu0 0.0
  %764 = vmatpush1.msra.mxu0 0.0
  %765 = vmatprep.subr.mxu0 0.0
  %766 = vmatpush1.msra.mxu0 0.0
  %767 = vmatprep.subr.mxu0 0.0
  %768 = vmatpush1.msra.mxu0 %v42
  %769 = vmatprep.subr.mxu0 0.0
  %770 = vmatpush1.msra.mxu0 %v41
  %771 = vmatprep.subr.mxu0 0.0
  %772 = vmatpush1.msra.mxu0 %v40
  %773 = vmatprep.subr.mxu0 0.0
  %774 = vmatpush1.msra.mxu0 %v39
  %775 = vmatprep.subr.mxu0 0.0
  %776 = vmatpush2.msra.mxu0 0.0
  %777 = vmatprep.subr.mxu0 0.0
  %778 = vmatpush2.msra.mxu0 0.0
  %779 = vmatprep.subr.mxu0 0.0
  %780 = vmatpush2.msra.mxu0 0.0
  %781 = vmatprep.subr.mxu0 0.0
  %782 = vmatpush2.msra.mxu0 0.0
  %783 = vmatprep.subr.mxu0 0.0
  %784 = vmatpush2.msra.mxu0 0.0
  %785 = vmatprep.subr.mxu0 0.0
  %786 = vmatpush2.msra.mxu0 0.0
  %787 = vmatprep.subr.mxu0 0.0
  %788 = vmatpush2.msra.mxu0 0.0
  %789 = vmatprep.subr.mxu0 0.0
  %790 = vmatpush2.msra.mxu0 0.0
  %791 = vmatprep.subr.mxu0 0.0
  %792 = vmatpush2.msra.mxu0 0.0
  %793 = vmatprep.subr.mxu0 0.0
  %794 = vmatpush2.msra.mxu0 0.0
  %795 = vmatprep.subr.mxu0 0.0
  %796 = vmatpush2.msra.mxu0 0.0
  %797 = vmatprep.subr.mxu0 0.0
  %798 = vmatpush2.msra.mxu0 0.0
  %799 = vmatprep.subr.mxu0 0.0
  %800 = vmatpush2.msra.mxu0 0.0
  %801 = vmatprep.subr.mxu0 0.0
  %802 = vmatpush2.msra.mxu0 0.0
  %803 = vmatprep.subr.mxu0 0.0
  %804 = vmatpush2.msra.mxu0 0.0
  %805 = vmatprep.subr.mxu0 0.0
  %806 = vmatpush2.msra.mxu0 0.0
  %807 = vmatprep.mubr.f32.mxu0 0.0
  %808 = vmatmul.mubr.f32.gmra.mxu0 %v571
  %v809 = vpop.f32.mrf.mxu0
  %v810 = vadd.f32 0.0, %v809
  %v811 = vpop.f32.mrf.mxu0
  %812 = vdwg.mxu0
  %v813 = vadd.f32 %v170, %v810
  %v814 = vxor.u32 %v813, 2147483648
  %v815 = vmul.f32 %v814, 1.442695
  %v816 = vpow.pop %v815
  %v817 = vadd.f32 %v816, 1.0
  %v818 = vrcp.pop %v817
  %v819 = vmul.f32 1.0, %v818
  %v820 = vtanh.pop %v813
  %v821 = vmul.f32 %v819, %v561
  %823 = vrot.lane.b32.xlu0 %v820, 64
  %v824 = vpop.permute.xlu0 %823
  %v826 = vmul.f32 %v819, %v824
  %828 = vrot.lane.b32.xlu0 %v826, 32
  %v829 = vpop.permute.xlu0 %828
  %v831 = vadd.f32 %v821, %v829
  %v832 = vtanh.pop %v831
  %834 = vrot.lane.b32.xlu0 %v832, 64
  %v835 = vpop.permute.xlu0 %834
  %v837 = vmul.f32 %v819, %v835
  %839 = vrot.lane.b32.xlu0 %v837, 32
  %v840 = vpop.permute.xlu0 %839
  %v841 = vsel %vm198, %v840, 0
  %843 = vmatprep.subr.mxu0 0.0
  %844 = vmatpush1.msra.mxu0 0.0
  %845 = vmatprep.subr.mxu0 0.0
  %846 = vmatpush1.msra.mxu0 0.0
  %847 = vmatprep.subr.mxu0 0.0
  %848 = vmatpush1.msra.mxu0 0.0
  %849 = vmatprep.subr.mxu0 0.0
  %850 = vmatpush1.msra.mxu0 0.0
  %851 = vmatprep.subr.mxu0 0.0
  %852 = vmatpush1.msra.mxu0 0.0
  %853 = vmatprep.subr.mxu0 0.0
  %854 = vmatpush1.msra.mxu0 0.0
  %855 = vmatprep.subr.mxu0 0.0
  %856 = vmatpush1.msra.mxu0 0.0
  %857 = vmatprep.subr.mxu0 0.0
  %858 = vmatpush1.msra.mxu0 0.0
  %859 = vmatprep.subr.mxu0 0.0
  %860 = vmatpush1.msra.mxu0 0.0
  %861 = vmatprep.subr.mxu0 0.0
  %862 = vmatpush1.msra.mxu0 0.0
  %863 = vmatprep.subr.mxu0 0.0
  %864 = vmatpush1.msra.mxu0 0.0
  %865 = vmatprep.subr.mxu0 0.0
  %866 = vmatpush1.msra.mxu0 0.0
  %867 = vmatprep.subr.mxu0 0.0
  %868 = vmatpush1.msra.mxu0 %v38
  %869 = vmatprep.subr.mxu0 0.0
  %870 = vmatpush1.msra.mxu0 %v37
  %871 = vmatprep.subr.mxu0 0.0
  %872 = vmatpush1.msra.mxu0 %v36
  %873 = vmatprep.subr.mxu0 0.0
  %874 = vmatpush1.msra.mxu0 %v35
  %875 = vmatprep.subr.mxu0 0.0
  %876 = vmatpush2.msra.mxu0 0.0
  %877 = vmatprep.subr.mxu0 0.0
  %878 = vmatpush2.msra.mxu0 0.0
  %879 = vmatprep.subr.mxu0 0.0
  %880 = vmatpush2.msra.mxu0 0.0
  %881 = vmatprep.subr.mxu0 0.0
  %882 = vmatpush2.msra.mxu0 0.0
  %883 = vmatprep.subr.mxu0 0.0
  %884 = vmatpush2.msra.mxu0 0.0
  %885 = vmatprep.subr.mxu0 0.0
  %886 = vmatpush2.msra.mxu0 0.0
  %887 = vmatprep.subr.mxu0 0.0
  %888 = vmatpush2.msra.mxu0 0.0
  %889 = vmatprep.subr.mxu0 0.0
  %890 = vmatpush2.msra.mxu0 0.0
  %891 = vmatprep.subr.mxu0 0.0
  %892 = vmatpush2.msra.mxu0 0.0
  %893 = vmatprep.subr.mxu0 0.0
  %894 = vmatpush2.msra.mxu0 0.0
  %895 = vmatprep.subr.mxu0 0.0
  %896 = vmatpush2.msra.mxu0 0.0
  %897 = vmatprep.subr.mxu0 0.0
  %898 = vmatpush2.msra.mxu0 0.0
  %899 = vmatprep.subr.mxu0 0.0
  %900 = vmatpush2.msra.mxu0 0.0
  %901 = vmatprep.subr.mxu0 0.0
  %902 = vmatpush2.msra.mxu0 0.0
  %903 = vmatprep.subr.mxu0 0.0
  %904 = vmatpush2.msra.mxu0 0.0
  %905 = vmatprep.subr.mxu0 0.0
  %906 = vmatpush2.msra.mxu0 0.0
  %907 = vmatprep.mubr.f32.mxu0 0.0
  %908 = vmatmul.mubr.f32.gmra.mxu0 %v841
  %v909 = vpop.f32.mrf.mxu0
  %v910 = vadd.f32 %v301, %v909
  %v911 = vpop.f32.mrf.mxu0
  %912 = vdwg.mxu0
  %914 = vrot.lane.b32.xlu0 %v742, 32
  %v915 = vpop.permute.xlu0 %914
  %v916 = vsel %vm198, %v915, 0
  %918 = vmatprep.subr.mxu0 0.0
  %919 = vmatpush1.msra.mxu0 0.0
  %920 = vmatprep.subr.mxu0 0.0
  %921 = vmatpush1.msra.mxu0 0.0
  %922 = vmatprep.subr.mxu0 0.0
  %923 = vmatpush1.msra.mxu0 0.0
  %924 = vmatprep.subr.mxu0 0.0
  %925 = vmatpush1.msra.mxu0 0.0
  %926 = vmatprep.subr.mxu0 0.0
  %927 = vmatpush1.msra.mxu0 0.0
  %928 = vmatprep.subr.mxu0 0.0
  %929 = vmatpush1.msra.mxu0 0.0
  %930 = vmatprep.subr.mxu0 0.0
  %931 = vmatpush1.msra.mxu0 0.0
  %932 = vmatprep.subr.mxu0 0.0
  %933 = vmatpush1.msra.mxu0 0.0
  %934 = vmatprep.subr.mxu0 0.0
  %935 = vmatpush1.msra.mxu0 0.0
  %936 = vmatprep.subr.mxu0 0.0
  %937 = vmatpush1.msra.mxu0 0.0
  %938 = vmatprep.subr.mxu0 0.0
  %939 = vmatpush1.msra.mxu0 0.0
  %940 = vmatprep.subr.mxu0 0.0
  %941 = vmatpush1.msra.mxu0 0.0
  %942 = vmatprep.subr.mxu0 0.0
  %943 = vmatpush1.msra.mxu0 %v46
  %944 = vmatprep.subr.mxu0 0.0
  %945 = vmatpush1.msra.mxu0 %v45
  %946 = vmatprep.subr.mxu0 0.0
  %947 = vmatpush1.msra.mxu0 %v44
  %948 = vmatprep.subr.mxu0 0.0
  %949 = vmatpush1.msra.mxu0 %v43
  %950 = vmatprep.subr.mxu0 0.0
  %951 = vmatpush2.msra.mxu0 0.0
  %952 = vmatprep.subr.mxu0 0.0
  %953 = vmatpush2.msra.mxu0 0.0
  %954 = vmatprep.subr.mxu0 0.0
  %955 = vmatpush2.msra.mxu0 0.0
  %956 = vmatprep.subr.mxu0 0.0
  %957 = vmatpush2.msra.mxu0 0.0
  %958 = vmatprep.subr.mxu0 0.0
  %959 = vmatpush2.msra.mxu0 0.0
  %960 = vmatprep.subr.mxu0 0.0
  %961 = vmatpush2.msra.mxu0 0.0
  %962 = vmatprep.subr.mxu0 0.0
  %963 = vmatpush2.msra.mxu0 0.0
  %964 = vmatprep.subr.mxu0 0.0
  %965 = vmatpush2.msra.mxu0 0.0
  %966 = vmatprep.subr.mxu0 0.0
  %967 = vmatpush2.msra.mxu0 0.0
  %968 = vmatprep.subr.mxu0 0.0
  %969 = vmatpush2.msra.mxu0 0.0
  %970 = vmatprep.subr.mxu0 0.0
  %971 = vmatpush2.msra.mxu0 0.0
  %972 = vmatprep.subr.mxu0 0.0
  %973 = vmatpush2.msra.mxu0 0.0
  %974 = vmatprep.subr.mxu0 0.0
  %975 = vmatpush2.msra.mxu0 0.0
  %976 = vmatprep.subr.mxu0 0.0
  %977 = vmatpush2.msra.mxu0 0.0
  %978 = vmatprep.subr.mxu0 0.0
  %979 = vmatpush2.msra.mxu0 0.0
  %980 = vmatprep.subr.mxu0 0.0
  %981 = vmatpush2.msra.mxu0 0.0
  %982 = vmatprep.mubr.f32.mxu0 0.0
  %983 = vmatmul.mubr.f32.gmra.mxu0 %v916
  %v984 = vpop.f32.mrf.mxu0
  %v985 = vadd.f32 0.0, %v984
  %v986 = vpop.f32.mrf.mxu0
  %987 = vdwg.mxu0
  %v988 = vadd.f32 %v910, %v985
  %v989 = vxor.u32 %v988, 2147483648
  %v990 = vmul.f32 %v989, 1.442695
  %v991 = vpow.pop %v990
  %v992 = vadd.f32 %v991, 1.0
  %v993 = vrcp.pop %v992
  %v994 = vmul.f32 1.0, %v993
  %v995 = vtanh.pop %v988
  %v996 = vmul.f32 %v994, %v736
  %998 = vrot.lane.b32.xlu0 %v995, 64
  %v999 = vpop.permute.xlu0 %998
  %v1001 = vmul.f32 %v994, %v999
  %1003 = vrot.lane.b32.xlu0 %v1001, 32
  %v1004 = vpop.permute.xlu0 %1003
  %v1006 = vadd.f32 %v996, %v1004
  %v1007 = vtanh.pop %v1006
  %1009 = vrot.lane.b32.xlu0 %v1007, 64
  %v1010 = vpop.permute.xlu0 %1009
  %v1012 = vmul.f32 %v994, %v1010
  %1013 = vmatprep.subr.mxu0 0.0
  %1014 = vmatpush1.msra.mxu0 0.0
  %1015 = vmatprep.subr.mxu0 0.0
  %1016 = vmatpush1.msra.mxu0 0.0
  %1017 = vmatprep.subr.mxu0 0.0
  %1018 = vmatpush1.msra.mxu0 0.0
  %1019 = vmatprep.subr.mxu0 0.0
  %1020 = vmatpush1.msra.mxu0 0.0
  %1021 = vmatprep.subr.mxu0 0.0
  %1022 = vmatpush1.msra.mxu0 0.0
  %1023 = vmatprep.subr.mxu0 0.0
  %1024 = vmatpush1.msra.mxu0 0.0
  %1025 = vmatprep.subr.mxu0 0.0
  %1026 = vmatpush1.msra.mxu0 0.0
  %1027 = vmatprep.subr.mxu0 0.0
  %1028 = vmatpush1.msra.mxu0 0.0
  %1029 = vmatprep.subr.mxu0 0.0
  %1030 = vmatpush1.msra.mxu0 0.0
  %1031 = vmatprep.subr.mxu0 0.0
  %1032 = vmatpush1.msra.mxu0 0.0
  %1033 = vmatprep.subr.mxu0 0.0
  %1034 = vmatpush1.msra.mxu0 0.0
  %1035 = vmatprep.subr.mxu0 0.0
  %1036 = vmatpush1.msra.mxu0 0.0
  %1037 = vmatprep.subr.mxu0 0.0
  %1038 = vmatpush1.msra.mxu0 %v42
  %1039 = vmatprep.subr.mxu0 0.0
  %1040 = vmatpush1.msra.mxu0 %v41
  %1041 = vmatprep.subr.mxu0 0.0
  %1042 = vmatpush1.msra.mxu0 %v40
  %1043 = vmatprep.subr.mxu0 0.0
  %1044 = vmatpush1.msra.mxu0 %v39
  %1045 = vmatprep.subr.mxu0 0.0
  %1046 = vmatpush2.msra.mxu0 0.0
  %1047 = vmatprep.subr.mxu0 0.0
  %1048 = vmatpush2.msra.mxu0 0.0
  %1049 = vmatprep.subr.mxu0 0.0
  %1050 = vmatpush2.msra.mxu0 0.0
  %1051 = vmatprep.subr.mxu0 0.0
  %1052 = vmatpush2.msra.mxu0 0.0
  %1053 = vmatprep.subr.mxu0 0.0
  %1054 = vmatpush2.msra.mxu0 0.0
  %1055 = vmatprep.subr.mxu0 0.0
  %1056 = vmatpush2.msra.mxu0 0.0
  %1057 = vmatprep.subr.mxu0 0.0
  %1058 = vmatpush2.msra.mxu0 0.0
  %1059 = vmatprep.subr.mxu0 0.0
  %1060 = vmatpush2.msra.mxu0 0.0
  %1061 = vmatprep.subr.mxu0 0.0
  %1062 = vmatpush2.msra.mxu0 0.0
  %1063 = vmatprep.subr.mxu0 0.0
  %1064 = vmatpush2.msra.mxu0 0.0
  %1065 = vmatprep.subr.mxu0 0.0
  %1066 = vmatpush2.msra.mxu0 0.0
  %1067 = vmatprep.subr.mxu0 0.0
  %1068 = vmatpush2.msra.mxu0 0.0
  %1069 = vmatprep.subr.mxu0 0.0
  %1070 = vmatpush2.msra.mxu0 0.0
  %1071 = vmatprep.subr.mxu0 0.0
  %1072 = vmatpush2.msra.mxu0 0.0
  %1073 = vmatprep.subr.mxu0 0.0
  %1074 = vmatpush2.msra.mxu0 0.0
  %1075 = vmatprep.subr.mxu0 0.0
  %1076 = vmatpush2.msra.mxu0 0.0
  %1077 = vmatprep.mubr.f32.mxu0 0.0
  %1078 = vmatmul.mubr.f32.gmra.mxu0 %v841
  %v1079 = vpop.f32.mrf.mxu0
  %v1080 = vadd.f32 0.0, %v1079
  %v1081 = vpop.f32.mrf.mxu0
  %1082 = vdwg.mxu0
  %v1083 = vadd.f32 %v175, %v1080
  %v1084 = vxor.u32 %v1083, 2147483648
  %v1085 = vmul.f32 %v1084, 1.442695
  %v1086 = vpow.pop %v1085
  %v1087 = vadd.f32 %v1086, 1.0
  %v1088 = vrcp.pop %v1087
  %v1089 = vmul.f32 1.0, %v1088
  %v1090 = vtanh.pop %v1083
  %v1091 = vmul.f32 %v1089, %v831
  %1093 = vrot.lane.b32.xlu0 %v1090, 64
  %v1094 = vpop.permute.xlu0 %1093
  %v1096 = vmul.f32 %v1089, %v1094
  %1098 = vrot.lane.b32.xlu0 %v1096, 32
  %v1099 = vpop.permute.xlu0 %1098
  %v1101 = vadd.f32 %v1091, %v1099
  %v1102 = vtanh.pop %v1101
  %1104 = vrot.lane.b32.xlu0 %v1102, 64
  %v1105 = vpop.permute.xlu0 %1104
  %v1107 = vmul.f32 %v1089, %v1105
  %1109 = vrot.lane.b32.xlu0 %v1107, 32
  %v1110 = vpop.permute.xlu0 %1109
  %v1111 = vsel %vm198, %v1110, 0
  %1113 = vmatprep.subr.mxu0 0.0
  %1114 = vmatpush1.msra.mxu0 0.0
  %1115 = vmatprep.subr.mxu0 0.0
  %1116 = vmatpush1.msra.mxu0 0.0
  %1117 = vmatprep.subr.mxu0 0.0
  %1118 = vmatpush1.msra.mxu0 0.0
  %1119 = vmatprep.subr.mxu0 0.0
  %1120 = vmatpush1.msra.mxu0 0.0
  %1121 = vmatprep.subr.mxu0 0.0
  %1122 = vmatpush1.msra.mxu0 0.0
  %1123 = vmatprep.subr.mxu0 0.0
  %1124 = vmatpush1.msra.mxu0 0.0
  %1125 = vmatprep.subr.mxu0 0.0
  %1126 = vmatpush1.msra.mxu0 0.0
  %1127 = vmatprep.subr.mxu0 0.0
  %1128 = vmatpush1.msra.mxu0 0.0
  %1129 = vmatprep.subr.mxu0 0.0
  %1130 = vmatpush1.msra.mxu0 0.0
  %1131 = vmatprep.subr.mxu0 0.0
  %1132 = vmatpush1.msra.mxu0 0.0
  %1133 = vmatprep.subr.mxu0 0.0
  %1134 = vmatpush1.msra.mxu0 0.0
  %1135 = vmatprep.subr.mxu0 0.0
  %1136 = vmatpush1.msra.mxu0 0.0
  %1137 = vmatprep.subr.mxu0 0.0
  %1138 = vmatpush1.msra.mxu0 %v38
  %1139 = vmatprep.subr.mxu0 0.0
  %1140 = vmatpush1.msra.mxu0 %v37
  %1141 = vmatprep.subr.mxu0 0.0
  %1142 = vmatpush1.msra.mxu0 %v36
  %1143 = vmatprep.subr.mxu0 0.0
  %1144 = vmatpush1.msra.mxu0 %v35
  %1145 = vmatprep.subr.mxu0 0.0
  %1146 = vmatpush2.msra.mxu0 0.0
  %1147 = vmatprep.subr.mxu0 0.0
  %1148 = vmatpush2.msra.mxu0 0.0
  %1149 = vmatprep.subr.mxu0 0.0
  %1150 = vmatpush2.msra.mxu0 0.0
  %1151 = vmatprep.subr.mxu0 0.0
  %1152 = vmatpush2.msra.mxu0 0.0
  %1153 = vmatprep.subr.mxu0 0.0
  %1154 = vmatpush2.msra.mxu0 0.0
  %1155 = vmatprep.subr.mxu0 0.0
  %1156 = vmatpush2.msra.mxu0 0.0
  %1157 = vmatprep.subr.mxu0 0.0
  %1158 = vmatpush2.msra.mxu0 0.0
  %1159 = vmatprep.subr.mxu0 0.0
  %1160 = vmatpush2.msra.mxu0 0.0
  %1161 = vmatprep.subr.mxu0 0.0
  %1162 = vmatpush2.msra.mxu0 0.0
  %1163 = vmatprep.subr.mxu0 0.0
  %1164 = vmatpush2.msra.mxu0 0.0
  %1165 = vmatprep.subr.mxu0 0.0
  %1166 = vmatpush2.msra.mxu0 0.0
  %1167 = vmatprep.subr.mxu0 0.0
  %1168 = vmatpush2.msra.mxu0 0.0
  %1169 = vmatprep.subr.mxu0 0.0
  %1170 = vmatpush2.msra.mxu0 0.0
  %1171 = vmatprep.subr.mxu0 0.0
  %1172 = vmatpush2.msra.mxu0 0.0
  %1173 = vmatprep.subr.mxu0 0.0
  %1174 = vmatpush2.msra.mxu0 0.0
  %1175 = vmatprep.subr.mxu0 0.0
  %1176 = vmatpush2.msra.mxu0 0.0
  %1177 = vmatprep.mubr.f32.mxu0 0.0
  %1178 = vmatmul.mubr.f32.gmra.mxu0 %v1111
  %v1179 = vpop.f32.mrf.mxu0
  %v1180 = vadd.f32 %v301, %v1179
  %v1181 = vpop.f32.mrf.mxu0
  %1182 = vdwg.mxu0
  %1184 = vrot.lane.b32.xlu0 %v1012, 32
  %v1185 = vpop.permute.xlu0 %1184
  %v1186 = vsel %vm198, %v1185, 0
  %1188 = vmatprep.subr.mxu0 0.0
  %1189 = vmatpush1.msra.mxu0 0.0
  %1190 = vmatprep.subr.mxu0 0.0
  %1191 = vmatpush1.msra.mxu0 0.0
  %1192 = vmatprep.subr.mxu0 0.0
  %1193 = vmatpush1.msra.mxu0 0.0
  %1194 = vmatprep.subr.mxu0 0.0
  %1195 = vmatpush1.msra.mxu0 0.0
  %1196 = vmatprep.subr.mxu0 0.0
  %1197 = vmatpush1.msra.mxu0 0.0
  %1198 = vmatprep.subr.mxu0 0.0
  %1199 = vmatpush1.msra.mxu0 0.0
  %1200 = vmatprep.subr.mxu0 0.0
  %1201 = vmatpush1.msra.mxu0 0.0
  %1202 = vmatprep.subr.mxu0 0.0
  %1203 = vmatpush1.msra.mxu0 0.0
  %1204 = vmatprep.subr.mxu0 0.0
  %1205 = vmatpush1.msra.mxu0 0.0
  %1206 = vmatprep.subr.mxu0 0.0
  %1207 = vmatpush1.msra.mxu0 0.0
  %1208 = vmatprep.subr.mxu0 0.0
  %1209 = vmatpush1.msra.mxu0 0.0
  %1210 = vmatprep.subr.mxu0 0.0
  %1211 = vmatpush1.msra.mxu0 0.0
  %1212 = vmatprep.subr.mxu0 0.0
  %1213 = vmatpush1.msra.mxu0 %v46
  %1214 = vmatprep.subr.mxu0 0.0
  %1215 = vmatpush1.msra.mxu0 %v45
  %1216 = vmatprep.subr.mxu0 0.0
  %1217 = vmatpush1.msra.mxu0 %v44
  %1218 = vmatprep.subr.mxu0 0.0
  %1219 = vmatpush1.msra.mxu0 %v43
  %1220 = vmatprep.subr.mxu0 0.0
  %1221 = vmatpush2.msra.mxu0 0.0
  %1222 = vmatprep.subr.mxu0 0.0
  %1223 = vmatpush2.msra.mxu0 0.0
  %1224 = vmatprep.subr.mxu0 0.0
  %1225 = vmatpush2.msra.mxu0 0.0
  %1226 = vmatprep.subr.mxu0 0.0
  %1227 = vmatpush2.msra.mxu0 0.0
  %1228 = vmatprep.subr.mxu0 0.0
  %1229 = vmatpush2.msra.mxu0 0.0
  %1230 = vmatprep.subr.mxu0 0.0
  %1231 = vmatpush2.msra.mxu0 0.0
  %1232 = vmatprep.subr.mxu0 0.0
  %1233 = vmatpush2.msra.mxu0 0.0
  %1234 = vmatprep.subr.mxu0 0.0
  %1235 = vmatpush2.msra.mxu0 0.0
  %1236 = vmatprep.subr.mxu0 0.0
  %1237 = vmatpush2.msra.mxu0 0.0
  %1238 = vmatprep.subr.mxu0 0.0
  %1239 = vmatpush2.msra.mxu0 0.0
  %1240 = vmatprep.subr.mxu0 0.0
  %1241 = vmatpush2.msra.mxu0 0.0
  %1242 = vmatprep.subr.mxu0 0.0
  %1243 = vmatpush2.msra.mxu0 0.0
  %1244 = vmatprep.subr.mxu0 0.0
  %1245 = vmatpush2.msra.mxu0 0.0
  %1246 = vmatprep.subr.mxu0 0.0
  %1247 = vmatpush2.msra.mxu0 0.0
  %1248 = vmatprep.subr.mxu0 0.0
  %1249 = vmatpush2.msra.mxu0 0.0
  %1250 = vmatprep.subr.mxu0 0.0
  %1251 = vmatpush2.msra.mxu0 0.0
  %1252 = vmatprep.mubr.f32.mxu0 0.0
  %1253 = vmatmul.mubr.f32.gmra.mxu0 %v1186
  %v1254 = vpop.f32.mrf.mxu0
  %v1255 = vadd.f32 0.0, %v1254
  %v1256 = vpop.f32.mrf.mxu0
  %1257 = vdwg.mxu0
  %v1258 = vadd.f32 %v1180, %v1255
  %v1259 = vxor.u32 %v1258, 2147483648
  %v1260 = vmul.f32 %v1259, 1.442695
  %v1261 = vpow.pop %v1260
  %v1262 = vadd.f32 %v1261, 1.0
  %v1263 = vrcp.pop %v1262
  %v1264 = vmul.f32 1.0, %v1263
  %v1265 = vtanh.pop %v1258
  %v1266 = vmul.f32 %v1264, %v1006
  %1268 = vrot.lane.b32.xlu0 %v1265, 64
  %v1269 = vpop.permute.xlu0 %1268
  %v1271 = vmul.f32 %v1264, %v1269
  %1273 = vrot.lane.b32.xlu0 %v1271, 32
  %v1274 = vpop.permute.xlu0 %1273
  %v1276 = vadd.f32 %v1266, %v1274
  %v1277 = vtanh.pop %v1276
  %1279 = vrot.lane.b32.xlu0 %v1277, 64
  %v1280 = vpop.permute.xlu0 %1279
  %v1282 = vmul.f32 %v1264, %v1280
  %1283 = vmatprep.subr.mxu0 0.0
  %1284 = vmatpush1.msra.mxu0 0.0
  %1285 = vmatprep.subr.mxu0 0.0
  %1286 = vmatpush1.msra.mxu0 0.0
  %1287 = vmatprep.subr.mxu0 0.0
  %1288 = vmatpush1.msra.mxu0 0.0
  %1289 = vmatprep.subr.mxu0 0.0
  %1290 = vmatpush1.msra.mxu0 0.0
  %1291 = vmatprep.subr.mxu0 0.0
  %1292 = vmatpush1.msra.mxu0 0.0
  %1293 = vmatprep.subr.mxu0 0.0
  %1294 = vmatpush1.msra.mxu0 0.0
  %1295 = vmatprep.subr.mxu0 0.0
  %1296 = vmatpush1.msra.mxu0 0.0
  %1297 = vmatprep.subr.mxu0 0.0
  %1298 = vmatpush1.msra.mxu0 0.0
  %1299 = vmatprep.subr.mxu0 0.0
  %1300 = vmatpush1.msra.mxu0 0.0
  %1301 = vmatprep.subr.mxu0 0.0
  %1302 = vmatpush1.msra.mxu0 0.0
  %1303 = vmatprep.subr.mxu0 0.0
  %1304 = vmatpush1.msra.mxu0 0.0
  %1305 = vmatprep.subr.mxu0 0.0
  %1306 = vmatpush1.msra.mxu0 0.0
  %1307 = vmatprep.subr.mxu0 0.0
  %1308 = vmatpush1.msra.mxu0 %v42
  %1309 = vmatprep.subr.mxu0 0.0
  %1310 = vmatpush1.msra.mxu0 %v41
  %1311 = vmatprep.subr.mxu0 0.0
  %1312 = vmatpush1.msra.mxu0 %v40
  %1313 = vmatprep.subr.mxu0 0.0
  %1314 = vmatpush1.msra.mxu0 %v39
  %1315 = vmatprep.subr.mxu0 0.0
  %1316 = vmatpush2.msra.mxu0 0.0
  %1317 = vmatprep.subr.mxu0 0.0
  %1318 = vmatpush2.msra.mxu0 0.0
  %1319 = vmatprep.subr.mxu0 0.0
  %1320 = vmatpush2.msra.mxu0 0.0
  %1321 = vmatprep.subr.mxu0 0.0
  %1322 = vmatpush2.msra.mxu0 0.0
  %1323 = vmatprep.subr.mxu0 0.0
  %1324 = vmatpush2.msra.mxu0 0.0
  %1325 = vmatprep.subr.mxu0 0.0
  %1326 = vmatpush2.msra.mxu0 0.0
  %1327 = vmatprep.subr.mxu0 0.0
  %1328 = vmatpush2.msra.mxu0 0.0
  %1329 = vmatprep.subr.mxu0 0.0
  %1330 = vmatpush2.msra.mxu0 0.0
  %1331 = vmatprep.subr.mxu0 0.0
  %1332 = vmatpush2.msra.mxu0 0.0
  %1333 = vmatprep.subr.mxu0 0.0
  %1334 = vmatpush2.msra.mxu0 0.0
  %1335 = vmatprep.subr.mxu0 0.0
  %1336 = vmatpush2.msra.mxu0 0.0
  %1337 = vmatprep.subr.mxu0 0.0
  %1338 = vmatpush2.msra.mxu0 0.0
  %1339 = vmatprep.subr.mxu0 0.0
  %1340 = vmatpush2.msra.mxu0 0.0
  %1341 = vmatprep.subr.mxu0 0.0
  %1342 = vmatpush2.msra.mxu0 0.0
  %1343 = vmatprep.subr.mxu0 0.0
  %1344 = vmatpush2.msra.mxu0 0.0
  %1345 = vmatprep.subr.mxu0 0.0
  %1346 = vmatpush2.msra.mxu0 0.0
  %1347 = vmatprep.mubr.f32.mxu0 0.0
  %1348 = vmatmul.mubr.f32.gmra.mxu0 %v1111
  %v1349 = vpop.f32.mrf.mxu0
  %v1350 = vadd.f32 0.0, %v1349
  %v1351 = vpop.f32.mrf.mxu0
  %1352 = vdwg.mxu0
  %v1353 = vadd.f32 %v180, %v1350
  %v1354 = vxor.u32 %v1353, 2147483648
  %v1355 = vmul.f32 %v1354, 1.442695
  %v1356 = vpow.pop %v1355
  %v1357 = vadd.f32 %v1356, 1.0
  %v1358 = vrcp.pop %v1357
  %v1359 = vmul.f32 1.0, %v1358
  %v1360 = vtanh.pop %v1353
  %v1361 = vmul.f32 %v1359, %v1101
  %1363 = vrot.lane.b32.xlu0 %v1360, 64
  %v1364 = vpop.permute.xlu0 %1363
  %v1366 = vmul.f32 %v1359, %v1364
  %1368 = vrot.lane.b32.xlu0 %v1366, 32
  %v1369 = vpop.permute.xlu0 %1368
  %v1371 = vadd.f32 %v1361, %v1369
  %v1372 = vtanh.pop %v1371
  %1374 = vrot.lane.b32.xlu0 %v1372, 64
  %v1375 = vpop.permute.xlu0 %1374
  %v1377 = vmul.f32 %v1359, %v1375
  %1379 = vrot.lane.b32.xlu0 %v1377, 32
  %v1380 = vpop.permute.xlu0 %1379
  %v1381 = vsel %vm198, %v1380, 0
  %1383 = vmatprep.subr.mxu0 0.0
  %1384 = vmatpush1.msra.mxu0 0.0
  %1385 = vmatprep.subr.mxu0 0.0
  %1386 = vmatpush1.msra.mxu0 0.0
  %1387 = vmatprep.subr.mxu0 0.0
  %1388 = vmatpush1.msra.mxu0 0.0
  %1389 = vmatprep.subr.mxu0 0.0
  %1390 = vmatpush1.msra.mxu0 0.0
  %1391 = vmatprep.subr.mxu0 0.0
  %1392 = vmatpush1.msra.mxu0 0.0
  %1393 = vmatprep.subr.mxu0 0.0
  %1394 = vmatpush1.msra.mxu0 0.0
  %1395 = vmatprep.subr.mxu0 0.0
  %1396 = vmatpush1.msra.mxu0 0.0
  %1397 = vmatprep.subr.mxu0 0.0
  %1398 = vmatpush1.msra.mxu0 0.0
  %1399 = vmatprep.subr.mxu0 0.0
  %1400 = vmatpush1.msra.mxu0 0.0
  %1401 = vmatprep.subr.mxu0 0.0
  %1402 = vmatpush1.msra.mxu0 0.0
  %1403 = vmatprep.subr.mxu0 0.0
  %1404 = vmatpush1.msra.mxu0 0.0
  %1405 = vmatprep.subr.mxu0 0.0
  %1406 = vmatpush1.msra.mxu0 0.0
  %1407 = vmatprep.subr.mxu0 0.0
  %1408 = vmatpush1.msra.mxu0 %v38
  %1409 = vmatprep.subr.mxu0 0.0
  %1410 = vmatpush1.msra.mxu0 %v37
  %1411 = vmatprep.subr.mxu0 0.0
  %1412 = vmatpush1.msra.mxu0 %v36
  %1413 = vmatprep.subr.mxu0 0.0
  %1414 = vmatpush1.msra.mxu0 %v35
  %1415 = vmatprep.subr.mxu0 0.0
  %1416 = vmatpush2.msra.mxu0 0.0
  %1417 = vmatprep.subr.mxu0 0.0
  %1418 = vmatpush2.msra.mxu0 0.0
  %1419 = vmatprep.subr.mxu0 0.0
  %1420 = vmatpush2.msra.mxu0 0.0
  %1421 = vmatprep.subr.mxu0 0.0
  %1422 = vmatpush2.msra.mxu0 0.0
  %1423 = vmatprep.subr.mxu0 0.0
  %1424 = vmatpush2.msra.mxu0 0.0
  %1425 = vmatprep.subr.mxu0 0.0
  %1426 = vmatpush2.msra.mxu0 0.0
  %1427 = vmatprep.subr.mxu0 0.0
  %1428 = vmatpush2.msra.mxu0 0.0
  %1429 = vmatprep.subr.mxu0 0.0
  %1430 = vmatpush2.msra.mxu0 0.0
  %1431 = vmatprep.subr.mxu0 0.0
  %1432 = vmatpush2.msra.mxu0 0.0
  %1433 = vmatprep.subr.mxu0 0.0
  %1434 = vmatpush2.msra.mxu0 0.0
  %1435 = vmatprep.subr.mxu0 0.0
  %1436 = vmatpush2.msra.mxu0 0.0
  %1437 = vmatprep.subr.mxu0 0.0
  %1438 = vmatpush2.msra.mxu0 0.0
  %1439 = vmatprep.subr.mxu0 0.0
  %1440 = vmatpush2.msra.mxu0 0.0
  %1441 = vmatprep.subr.mxu0 0.0
  %1442 = vmatpush2.msra.mxu0 0.0
  %1443 = vmatprep.subr.mxu0 0.0
  %1444 = vmatpush2.msra.mxu0 0.0
  %1445 = vmatprep.subr.mxu0 0.0
  %1446 = vmatpush2.msra.mxu0 0.0
  %1447 = vmatprep.mubr.f32.mxu0 0.0
  %1448 = vmatmul.mubr.f32.gmra.mxu0 %v1381
  %v1449 = vpop.f32.mrf.mxu0
  %v1450 = vadd.f32 %v301, %v1449
  %v1451 = vpop.f32.mrf.mxu0
  %1452 = vdwg.mxu0
  %1454 = vrot.lane.b32.xlu0 %v1282, 32
  %v1455 = vpop.permute.xlu0 %1454
  %v1456 = vsel %vm198, %v1455, 0
  %1458 = vmatprep.subr.mxu0 0.0
  %1459 = vmatpush1.msra.mxu0 0.0
  %1460 = vmatprep.subr.mxu0 0.0
  %1461 = vmatpush1.msra.mxu0 0.0
  %1462 = vmatprep.subr.mxu0 0.0
  %1463 = vmatpush1.msra.mxu0 0.0
  %1464 = vmatprep.subr.mxu0 0.0
  %1465 = vmatpush1.msra.mxu0 0.0
  %1466 = vmatprep.subr.mxu0 0.0
  %1467 = vmatpush1.msra.mxu0 0.0
  %1468 = vmatprep.subr.mxu0 0.0
  %1469 = vmatpush1.msra.mxu0 0.0
  %1470 = vmatprep.subr.mxu0 0.0
  %1471 = vmatpush1.msra.mxu0 0.0
  %1472 = vmatprep.subr.mxu0 0.0
  %1473 = vmatpush1.msra.mxu0 0.0
  %1474 = vmatprep.subr.mxu0 0.0
  %1475 = vmatpush1.msra.mxu0 0.0
  %1476 = vmatprep.subr.mxu0 0.0
  %1477 = vmatpush1.msra.mxu0 0.0
  %1478 = vmatprep.subr.mxu0 0.0
  %1479 = vmatpush1.msra.mxu0 0.0
  %1480 = vmatprep.subr.mxu0 0.0
  %1481 = vmatpush1.msra.mxu0 0.0
  %1482 = vmatprep.subr.mxu0 0.0
  %1483 = vmatpush1.msra.mxu0 %v46
  %1484 = vmatprep.subr.mxu0 0.0
  %1485 = vmatpush1.msra.mxu0 %v45
  %1486 = vmatprep.subr.mxu0 0.0
  %1487 = vmatpush1.msra.mxu0 %v44
  %1488 = vmatprep.subr.mxu0 0.0
  %1489 = vmatpush1.msra.mxu0 %v43
  %1490 = vmatprep.subr.mxu0 0.0
  %1491 = vmatpush2.msra.mxu0 0.0
  %1492 = vmatprep.subr.mxu0 0.0
  %1493 = vmatpush2.msra.mxu0 0.0
  %1494 = vmatprep.subr.mxu0 0.0
  %1495 = vmatpush2.msra.mxu0 0.0
  %1496 = vmatprep.subr.mxu0 0.0
  %1497 = vmatpush2.msra.mxu0 0.0
  %1498 = vmatprep.subr.mxu0 0.0
  %1499 = vmatpush2.msra.mxu0 0.0
  %1500 = vmatprep.subr.mxu0 0.0
  %1501 = vmatpush2.msra.mxu0 0.0
  %1502 = vmatprep.subr.mxu0 0.0
  %1503 = vmatpush2.msra.mxu0 0.0
  %1504 = vmatprep.subr.mxu0 0.0
  %1505 = vmatpush2.msra.mxu0 0.0
  %1506 = vmatprep.subr.mxu0 0.0
  %1507 = vmatpush2.msra.mxu0 0.0
  %1508 = vmatprep.subr.mxu0 0.0
  %1509 = vmatpush2.msra.mxu0 0.0
  %1510 = vmatprep.subr.mxu0 0.0
  %1511 = vmatpush2.msra.mxu0 0.0
  %1512 = vmatprep.subr.mxu0 0.0
  %1513 = vmatpush2.msra.mxu0 0.0
  %1514 = vmatprep.subr.mxu0 0.0
  %1515 = vmatpush2.msra.mxu0 0.0
  %1516 = vmatprep.subr.mxu0 0.0
  %1517 = vmatpush2.msra.mxu0 0.0
  %1518 = vmatprep.subr.mxu0 0.0
  %1519 = vmatpush2.msra.mxu0 0.0
  %1520 = vmatprep.subr.mxu0 0.0
  %1521 = vmatpush2.msra.mxu0 0.0
  %1522 = vmatprep.mubr.f32.mxu0 0.0
  %1523 = vmatmul.mubr.f32.gmra.mxu0 %v1456
  %v1524 = vpop.f32.mrf.mxu0
  %v1525 = vadd.f32 0.0, %v1524
  %v1526 = vpop.f32.mrf.mxu0
  %1527 = vdwg.mxu0
  %v1528 = vadd.f32 %v1450, %v1525
  %v1529 = vxor.u32 %v1528, 2147483648
  %v1530 = vmul.f32 %v1529, 1.442695
  %v1531 = vpow.pop %v1530
  %v1532 = vadd.f32 %v1531, 1.0
  %v1533 = vrcp.pop %v1532
  %v1534 = vmul.f32 1.0, %v1533
  %v1535 = vtanh.pop %v1528
  %v1536 = vmul.f32 %v1534, %v1276
  %1538 = vrot.lane.b32.xlu0 %v1535, 64
  %v1539 = vpop.permute.xlu0 %1538
  %v1541 = vmul.f32 %v1534, %v1539
  %1543 = vrot.lane.b32.xlu0 %v1541, 32
  %v1544 = vpop.permute.xlu0 %1543
  %v1546 = vadd.f32 %v1536, %v1544
  %v1547 = vtanh.pop %v1546
  %1549 = vrot.lane.b32.xlu0 %v1547, 64
  %v1550 = vpop.permute.xlu0 %1549
  %v1552 = vmul.f32 %v1534, %v1550
  %1553 = vmatprep.subr.mxu0 0.0
  %1554 = vmatpush1.msra.mxu0 0.0
  %1555 = vmatprep.subr.mxu0 0.0
  %1556 = vmatpush1.msra.mxu0 0.0
  %1557 = vmatprep.subr.mxu0 0.0
  %1558 = vmatpush1.msra.mxu0 0.0
  %1559 = vmatprep.subr.mxu0 0.0
  %1560 = vmatpush1.msra.mxu0 0.0
  %1561 = vmatprep.subr.mxu0 0.0
  %1562 = vmatpush1.msra.mxu0 0.0
  %1563 = vmatprep.subr.mxu0 0.0
  %1564 = vmatpush1.msra.mxu0 0.0
  %1565 = vmatprep.subr.mxu0 0.0
  %1566 = vmatpush1.msra.mxu0 0.0
  %1567 = vmatprep.subr.mxu0 0.0
  %1568 = vmatpush1.msra.mxu0 0.0
  %1569 = vmatprep.subr.mxu0 0.0
  %1570 = vmatpush1.msra.mxu0 0.0
  %1571 = vmatprep.subr.mxu0 0.0
  %1572 = vmatpush1.msra.mxu0 0.0
  %1573 = vmatprep.subr.mxu0 0.0
  %1574 = vmatpush1.msra.mxu0 0.0
  %1575 = vmatprep.subr.mxu0 0.0
  %1576 = vmatpush1.msra.mxu0 0.0
  %1577 = vmatprep.subr.mxu0 0.0
  %1578 = vmatpush1.msra.mxu0 %v42
  %1579 = vmatprep.subr.mxu0 0.0
  %1580 = vmatpush1.msra.mxu0 %v41
  %1581 = vmatprep.subr.mxu0 0.0
  %1582 = vmatpush1.msra.mxu0 %v40
  %1583 = vmatprep.subr.mxu0 0.0
  %1584 = vmatpush1.msra.mxu0 %v39
  %1585 = vmatprep.subr.mxu0 0.0
  %1586 = vmatpush2.msra.mxu0 0.0
  %1587 = vmatprep.subr.mxu0 0.0
  %1588 = vmatpush2.msra.mxu0 0.0
  %1589 = vmatprep.subr.mxu0 0.0
  %1590 = vmatpush2.msra.mxu0 0.0
  %1591 = vmatprep.subr.mxu0 0.0
  %1592 = vmatpush2.msra.mxu0 0.0
  %1593 = vmatprep.subr.mxu0 0.0
  %1594 = vmatpush2.msra.mxu0 0.0
  %1595 = vmatprep.subr.mxu0 0.0
  %1596 = vmatpush2.msra.mxu0 0.0
  %1597 = vmatprep.subr.mxu0 0.0
  %1598 = vmatpush2.msra.mxu0 0.0
  %1599 = vmatprep.subr.mxu0 0.0
  %1600 = vmatpush2.msra.mxu0 0.0
  %1601 = vmatprep.subr.mxu0 0.0
  %1602 = vmatpush2.msra.mxu0 0.0
  %1603 = vmatprep.subr.mxu0 0.0
  %1604 = vmatpush2.msra.mxu0 0.0
  %1605 = vmatprep.subr.mxu0 0.0
  %1606 = vmatpush2.msra.mxu0 0.0
  %1607 = vmatprep.subr.mxu0 0.0
  %1608 = vmatpush2.msra.mxu0 0.0
  %1609 = vmatprep.subr.mxu0 0.0
  %1610 = vmatpush2.msra.mxu0 0.0
  %1611 = vmatprep.subr.mxu0 0.0
  %1612 = vmatpush2.msra.mxu0 0.0
  %1613 = vmatprep.subr.mxu0 0.0
  %1614 = vmatpush2.msra.mxu0 0.0
  %1615 = vmatprep.subr.mxu0 0.0
  %1616 = vmatpush2.msra.mxu0 0.0
  %1617 = vmatprep.mubr.f32.mxu0 0.0
  %1618 = vmatmul.mubr.f32.gmra.mxu0 %v1381
  %v1619 = vpop.f32.mrf.mxu0
  %v1620 = vadd.f32 0.0, %v1619
  %v1621 = vpop.f32.mrf.mxu0
  %1622 = vdwg.mxu0
  %v1623 = vadd.f32 %v185, %v1620
  %v1624 = vxor.u32 %v1623, 2147483648
  %v1625 = vmul.f32 %v1624, 1.442695
  %v1626 = vpow.pop %v1625
  %v1627 = vadd.f32 %v1626, 1.0
  %v1628 = vrcp.pop %v1627
  %v1629 = vmul.f32 1.0, %v1628
  %v1630 = vtanh.pop %v1623
  %v1631 = vmul.f32 %v1629, %v1371
  %1633 = vrot.lane.b32.xlu0 %v1630, 64
  %v1634 = vpop.permute.xlu0 %1633
  %v1636 = vmul.f32 %v1629, %v1634
  %1638 = vrot.lane.b32.xlu0 %v1636, 32
  %v1639 = vpop.permute.xlu0 %1638
  %v1641 = vadd.f32 %v1631, %v1639
  %v1642 = vtanh.pop %v1641
  %1644 = vrot.lane.b32.xlu0 %v1642, 64
  %v1645 = vpop.permute.xlu0 %1644
  %v1647 = vmul.f32 %v1629, %v1645
  %1649 = vrot.lane.b32.xlu0 %v1647, 32
  %v1650 = vpop.permute.xlu0 %1649
  %v1651 = vsel %vm198, %v1650, 0
  %1653 = vmatprep.subr.mxu0 0.0
  %1654 = vmatpush1.msra.mxu0 0.0
  %1655 = vmatprep.subr.mxu0 0.0
  %1656 = vmatpush1.msra.mxu0 0.0
  %1657 = vmatprep.subr.mxu0 0.0
  %1658 = vmatpush1.msra.mxu0 0.0
  %1659 = vmatprep.subr.mxu0 0.0
  %1660 = vmatpush1.msra.mxu0 0.0
  %1661 = vmatprep.subr.mxu0 0.0
  %1662 = vmatpush1.msra.mxu0 0.0
  %1663 = vmatprep.subr.mxu0 0.0
  %1664 = vmatpush1.msra.mxu0 0.0
  %1665 = vmatprep.subr.mxu0 0.0
  %1666 = vmatpush1.msra.mxu0 0.0
  %1667 = vmatprep.subr.mxu0 0.0
  %1668 = vmatpush1.msra.mxu0 0.0
  %1669 = vmatprep.subr.mxu0 0.0
  %1670 = vmatpush1.msra.mxu0 0.0
  %1671 = vmatprep.subr.mxu0 0.0
  %1672 = vmatpush1.msra.mxu0 0.0
  %1673 = vmatprep.subr.mxu0 0.0
  %1674 = vmatpush1.msra.mxu0 0.0
  %1675 = vmatprep.subr.mxu0 0.0
  %1676 = vmatpush1.msra.mxu0 0.0
  %1677 = vmatprep.subr.mxu0 0.0
  %1678 = vmatpush1.msra.mxu0 %v38
  %1679 = vmatprep.subr.mxu0 0.0
  %1680 = vmatpush1.msra.mxu0 %v37
  %1681 = vmatprep.subr.mxu0 0.0
  %1682 = vmatpush1.msra.mxu0 %v36
  %1683 = vmatprep.subr.mxu0 0.0
  %1684 = vmatpush1.msra.mxu0 %v35
  %1685 = vmatprep.subr.mxu0 0.0
  %1686 = vmatpush2.msra.mxu0 0.0
  %1687 = vmatprep.subr.mxu0 0.0
  %1688 = vmatpush2.msra.mxu0 0.0
  %1689 = vmatprep.subr.mxu0 0.0
  %1690 = vmatpush2.msra.mxu0 0.0
  %1691 = vmatprep.subr.mxu0 0.0
  %1692 = vmatpush2.msra.mxu0 0.0
  %1693 = vmatprep.subr.mxu0 0.0
  %1694 = vmatpush2.msra.mxu0 0.0
  %1695 = vmatprep.subr.mxu0 0.0
  %1696 = vmatpush2.msra.mxu0 0.0
  %1697 = vmatprep.subr.mxu0 0.0
  %1698 = vmatpush2.msra.mxu0 0.0
  %1699 = vmatprep.subr.mxu0 0.0
  %1700 = vmatpush2.msra.mxu0 0.0
  %1701 = vmatprep.subr.mxu0 0.0
  %1702 = vmatpush2.msra.mxu0 0.0
  %1703 = vmatprep.subr.mxu0 0.0
  %1704 = vmatpush2.msra.mxu0 0.0
  %1705 = vmatprep.subr.mxu0 0.0
  %1706 = vmatpush2.msra.mxu0 0.0
  %1707 = vmatprep.subr.mxu0 0.0
  %1708 = vmatpush2.msra.mxu0 0.0
  %1709 = vmatprep.subr.mxu0 0.0
  %1710 = vmatpush2.msra.mxu0 0.0
  %1711 = vmatprep.subr.mxu0 0.0
  %1712 = vmatpush2.msra.mxu0 0.0
  %1713 = vmatprep.subr.mxu0 0.0
  %1714 = vmatpush2.msra.mxu0 0.0
  %1715 = vmatprep.subr.mxu0 0.0
  %1716 = vmatpush2.msra.mxu0 0.0
  %1717 = vmatprep.mubr.f32.mxu0 0.0
  %1718 = vmatmul.mubr.f32.gmra.mxu0 %v1651
  %v1719 = vpop.f32.mrf.mxu0
  %v1720 = vadd.f32 %v301, %v1719
  %v1721 = vpop.f32.mrf.mxu0
  %1722 = vdwg.mxu0
  %1724 = vrot.lane.b32.xlu0 %v1552, 32
  %v1725 = vpop.permute.xlu0 %1724
  %v1726 = vsel %vm198, %v1725, 0
  %1728 = vmatprep.subr.mxu0 0.0
  %1729 = vmatpush1.msra.mxu0 0.0
  %1730 = vmatprep.subr.mxu0 0.0
  %1731 = vmatpush1.msra.mxu0 0.0
  %1732 = vmatprep.subr.mxu0 0.0
  %1733 = vmatpush1.msra.mxu0 0.0
  %1734 = vmatprep.subr.mxu0 0.0
  %1735 = vmatpush1.msra.mxu0 0.0
  %1736 = vmatprep.subr.mxu0 0.0
  %1737 = vmatpush1.msra.mxu0 0.0
  %1738 = vmatprep.subr.mxu0 0.0
  %1739 = vmatpush1.msra.mxu0 0.0
  %1740 = vmatprep.subr.mxu0 0.0
  %1741 = vmatpush1.msra.mxu0 0.0
  %1742 = vmatprep.subr.mxu0 0.0
  %1743 = vmatpush1.msra.mxu0 0.0
  %1744 = vmatprep.subr.mxu0 0.0
  %1745 = vmatpush1.msra.mxu0 0.0
  %1746 = vmatprep.subr.mxu0 0.0
  %1747 = vmatpush1.msra.mxu0 0.0
  %1748 = vmatprep.subr.mxu0 0.0
  %1749 = vmatpush1.msra.mxu0 0.0
  %1750 = vmatprep.subr.mxu0 0.0
  %1751 = vmatpush1.msra.mxu0 0.0
  %1752 = vmatprep.subr.mxu0 0.0
  %1753 = vmatpush1.msra.mxu0 %v46
  %1754 = vmatprep.subr.mxu0 0.0
  %1755 = vmatpush1.msra.mxu0 %v45
  %1756 = vmatprep.subr.mxu0 0.0
  %1757 = vmatpush1.msra.mxu0 %v44
  %1758 = vmatprep.subr.mxu0 0.0
  %1759 = vmatpush1.msra.mxu0 %v43
  %1760 = vmatprep.subr.mxu0 0.0
  %1761 = vmatpush2.msra.mxu0 0.0
  %1762 = vmatprep.subr.mxu0 0.0
  %1763 = vmatpush2.msra.mxu0 0.0
  %1764 = vmatprep.subr.mxu0 0.0
  %1765 = vmatpush2.msra.mxu0 0.0
  %1766 = vmatprep.subr.mxu0 0.0
  %1767 = vmatpush2.msra.mxu0 0.0
  %1768 = vmatprep.subr.mxu0 0.0
  %1769 = vmatpush2.msra.mxu0 0.0
  %1770 = vmatprep.subr.mxu0 0.0
  %1771 = vmatpush2.msra.mxu0 0.0
  %1772 = vmatprep.subr.mxu0 0.0
  %1773 = vmatpush2.msra.mxu0 0.0
  %1774 = vmatprep.subr.mxu0 0.0
  %1775 = vmatpush2.msra.mxu0 0.0
  %1776 = vmatprep.subr.mxu0 0.0
  %1777 = vmatpush2.msra.mxu0 0.0
  %1778 = vmatprep.subr.mxu0 0.0
  %1779 = vmatpush2.msra.mxu0 0.0
  %1780 = vmatprep.subr.mxu0 0.0
  %1781 = vmatpush2.msra.mxu0 0.0
  %1782 = vmatprep.subr.mxu0 0.0
  %1783 = vmatpush2.msra.mxu0 0.0
  %1784 = vmatprep.subr.mxu0 0.0
  %1785 = vmatpush2.msra.mxu0 0.0
  %1786 = vmatprep.subr.mxu0 0.0
  %1787 = vmatpush2.msra.mxu0 0.0
  %1788 = vmatprep.subr.mxu0 0.0
  %1789 = vmatpush2.msra.mxu0 0.0
  %1790 = vmatprep.subr.mxu0 0.0
  %1791 = vmatpush2.msra.mxu0 0.0
  %1792 = vmatprep.mubr.f32.mxu0 0.0
  %1793 = vmatmul.mubr.f32.gmra.mxu0 %v1726
  %v1794 = vpop.f32.mrf.mxu0
  %v1795 = vadd.f32 0.0, %v1794
  %v1796 = vpop.f32.mrf.mxu0
  %1797 = vdwg.mxu0
  %v1798 = vadd.f32 %v1720, %v1795
  %v1799 = vxor.u32 %v1798, 2147483648
  %v1800 = vmul.f32 %v1799, 1.442695
  %v1801 = vpow.pop %v1800
  %v1802 = vadd.f32 %v1801, 1.0
  %v1803 = vrcp.pop %v1802
  %v1804 = vmul.f32 1.0, %v1803
  %v1805 = vtanh.pop %v1798
  %v1806 = vmul.f32 %v1804, %v1546
  %1808 = vrot.lane.b32.xlu0 %v1805, 64
  %v1809 = vpop.permute.xlu0 %1808
  %v1811 = vmul.f32 %v1804, %v1809
  %1813 = vrot.lane.b32.xlu0 %v1811, 32
  %v1814 = vpop.permute.xlu0 %1813
  %v1816 = vadd.f32 %v1806, %v1814
  %v1817 = vtanh.pop %v1816
  %1819 = vrot.lane.b32.xlu0 %v1817, 64
  %v1820 = vpop.permute.xlu0 %1819
  %v1822 = vmul.f32 %v1804, %v1820
  %1823 = vmatprep.subr.mxu0 0.0
  %1824 = vmatpush1.msra.mxu0 0.0
  %1825 = vmatprep.subr.mxu0 0.0
  %1826 = vmatpush1.msra.mxu0 0.0
  %1827 = vmatprep.subr.mxu0 0.0
  %1828 = vmatpush1.msra.mxu0 0.0
  %1829 = vmatprep.subr.mxu0 0.0
  %1830 = vmatpush1.msra.mxu0 0.0
  %1831 = vmatprep.subr.mxu0 0.0
  %1832 = vmatpush1.msra.mxu0 0.0
  %1833 = vmatprep.subr.mxu0 0.0
  %1834 = vmatpush1.msra.mxu0 0.0
  %1835 = vmatprep.subr.mxu0 0.0
  %1836 = vmatpush1.msra.mxu0 0.0
  %1837 = vmatprep.subr.mxu0 0.0
  %1838 = vmatpush1.msra.mxu0 0.0
  %1839 = vmatprep.subr.mxu0 0.0
  %1840 = vmatpush1.msra.mxu0 0.0
  %1841 = vmatprep.subr.mxu0 0.0
  %1842 = vmatpush1.msra.mxu0 0.0
  %1843 = vmatprep.subr.mxu0 0.0
  %1844 = vmatpush1.msra.mxu0 0.0
  %1845 = vmatprep.subr.mxu0 0.0
  %1846 = vmatpush1.msra.mxu0 0.0
  %1847 = vmatprep.subr.mxu0 0.0
  %1848 = vmatpush1.msra.mxu0 %v42
  %1849 = vmatprep.subr.mxu0 0.0
  %1850 = vmatpush1.msra.mxu0 %v41
  %1851 = vmatprep.subr.mxu0 0.0
  %1852 = vmatpush1.msra.mxu0 %v40
  %1853 = vmatprep.subr.mxu0 0.0
  %1854 = vmatpush1.msra.mxu0 %v39
  %1855 = vmatprep.subr.mxu0 0.0
  %1856 = vmatpush2.msra.mxu0 0.0
  %1857 = vmatprep.subr.mxu0 0.0
  %1858 = vmatpush2.msra.mxu0 0.0
  %1859 = vmatprep.subr.mxu0 0.0
  %1860 = vmatpush2.msra.mxu0 0.0
  %1861 = vmatprep.subr.mxu0 0.0
  %1862 = vmatpush2.msra.mxu0 0.0
  %1863 = vmatprep.subr.mxu0 0.0
  %1864 = vmatpush2.msra.mxu0 0.0
  %1865 = vmatprep.subr.mxu0 0.0
  %1866 = vmatpush2.msra.mxu0 0.0
  %1867 = vmatprep.subr.mxu0 0.0
  %1868 = vmatpush2.msra.mxu0 0.0
  %1869 = vmatprep.subr.mxu0 0.0
  %1870 = vmatpush2.msra.mxu0 0.0
  %1871 = vmatprep.subr.mxu0 0.0
  %1872 = vmatpush2.msra.mxu0 0.0
  %1873 = vmatprep.subr.mxu0 0.0
  %1874 = vmatpush2.msra.mxu0 0.0
  %1875 = vmatprep.subr.mxu0 0.0
  %1876 = vmatpush2.msra.mxu0 0.0
  %1877 = vmatprep.subr.mxu0 0.0
  %1878 = vmatpush2.msra.mxu0 0.0
  %1879 = vmatprep.subr.mxu0 0.0
  %1880 = vmatpush2.msra.mxu0 0.0
  %1881 = vmatprep.subr.mxu0 0.0
  %1882 = vmatpush2.msra.mxu0 0.0
  %1883 = vmatprep.subr.mxu0 0.0
  %1884 = vmatpush2.msra.mxu0 0.0
  %1885 = vmatprep.subr.mxu0 0.0
  %1886 = vmatpush2.msra.mxu0 0.0
  %1887 = vmatprep.mubr.f32.mxu0 0.0
  %1888 = vmatmul.mubr.f32.gmra.mxu0 %v1651
  %v1889 = vpop.f32.mrf.mxu0
  %v1890 = vadd.f32 0.0, %v1889
  %v1891 = vpop.f32.mrf.mxu0
  %1892 = vdwg.mxu0
  %v1893 = vadd.f32 %v190, %v1890
  %v1894 = vxor.u32 %v1893, 2147483648
  %v1895 = vmul.f32 %v1894, 1.442695
  %v1896 = vpow.pop %v1895
  %v1897 = vadd.f32 %v1896, 1.0
  %v1898 = vrcp.pop %v1897
  %v1899 = vmul.f32 1.0, %v1898
  %v1900 = vtanh.pop %v1893
  %v1901 = vmul.f32 %v1899, %v1641
  %1903 = vrot.lane.b32.xlu0 %v1900, 64
  %v1904 = vpop.permute.xlu0 %1903
  %v1906 = vmul.f32 %v1899, %v1904
  %1908 = vrot.lane.b32.xlu0 %v1906, 32
  %v1909 = vpop.permute.xlu0 %1908
  %v1911 = vadd.f32 %v1901, %v1909
  %v1912 = vtanh.pop %v1911
  %1914 = vrot.lane.b32.xlu0 %v1912, 64
  %v1915 = vpop.permute.xlu0 %1914
  %v1917 = vmul.f32 %v1899, %v1915
  %1919 = vrot.lane.b32.xlu0 %v1917, 32
  %v1920 = vpop.permute.xlu0 %1919
  %v1921 = vsel %vm198, %v1920, 0
  %1923 = vmatprep.subr.mxu0 0.0
  %1924 = vmatpush1.msra.mxu0 0.0
  %1925 = vmatprep.subr.mxu0 0.0
  %1926 = vmatpush1.msra.mxu0 0.0
  %1927 = vmatprep.subr.mxu0 0.0
  %1928 = vmatpush1.msra.mxu0 0.0
  %1929 = vmatprep.subr.mxu0 0.0
  %1930 = vmatpush1.msra.mxu0 0.0
  %1931 = vmatprep.subr.mxu0 0.0
  %1932 = vmatpush1.msra.mxu0 0.0
  %1933 = vmatprep.subr.mxu0 0.0
  %1934 = vmatpush1.msra.mxu0 0.0
  %1935 = vmatprep.subr.mxu0 0.0
  %1936 = vmatpush1.msra.mxu0 0.0
  %1937 = vmatprep.subr.mxu0 0.0
  %1938 = vmatpush1.msra.mxu0 0.0
  %1939 = vmatprep.subr.mxu0 0.0
  %1940 = vmatpush1.msra.mxu0 0.0
  %1941 = vmatprep.subr.mxu0 0.0
  %1942 = vmatpush1.msra.mxu0 0.0
  %1943 = vmatprep.subr.mxu0 0.0
  %1944 = vmatpush1.msra.mxu0 0.0
  %1945 = vmatprep.subr.mxu0 0.0
  %1946 = vmatpush1.msra.mxu0 0.0
  %1947 = vmatprep.subr.mxu0 0.0
  %1948 = vmatpush1.msra.mxu0 %v38
  %1949 = vmatprep.subr.mxu0 0.0
  %1950 = vmatpush1.msra.mxu0 %v37
  %1951 = vmatprep.subr.mxu0 0.0
  %1952 = vmatpush1.msra.mxu0 %v36
  %1953 = vmatprep.subr.mxu0 0.0
  %1954 = vmatpush1.msra.mxu0 %v35
  %1955 = vmatprep.subr.mxu0 0.0
  %1956 = vmatpush2.msra.mxu0 0.0
  %1957 = vmatprep.subr.mxu0 0.0
  %1958 = vmatpush2.msra.mxu0 0.0
  %1959 = vmatprep.subr.mxu0 0.0
  %1960 = vmatpush2.msra.mxu0 0.0
  %1961 = vmatprep.subr.mxu0 0.0
  %1962 = vmatpush2.msra.mxu0 0.0
  %1963 = vmatprep.subr.mxu0 0.0
  %1964 = vmatpush2.msra.mxu0 0.0
  %1965 = vmatprep.subr.mxu0 0.0
  %1966 = vmatpush2.msra.mxu0 0.0
  %1967 = vmatprep.subr.mxu0 0.0
  %1968 = vmatpush2.msra.mxu0 0.0
  %1969 = vmatprep.subr.mxu0 0.0
  %1970 = vmatpush2.msra.mxu0 0.0
  %1971 = vmatprep.subr.mxu0 0.0
  %1972 = vmatpush2.msra.mxu0 0.0
  %1973 = vmatprep.subr.mxu0 0.0
  %1974 = vmatpush2.msra.mxu0 0.0
  %1975 = vmatprep.subr.mxu0 0.0
  %1976 = vmatpush2.msra.mxu0 0.0
  %1977 = vmatprep.subr.mxu0 0.0
  %1978 = vmatpush2.msra.mxu0 0.0
  %1979 = vmatprep.subr.mxu0 0.0
  %1980 = vmatpush2.msra.mxu0 0.0
  %1981 = vmatprep.subr.mxu0 0.0
  %1982 = vmatpush2.msra.mxu0 0.0
  %1983 = vmatprep.subr.mxu0 0.0
  %1984 = vmatpush2.msra.mxu0 0.0
  %1985 = vmatprep.subr.mxu0 0.0
  %1986 = vmatpush2.msra.mxu0 0.0
  %1987 = vmatprep.mubr.f32.mxu0 0.0
  %1988 = vmatmul.mubr.f32.gmra.mxu0 %v1921
  %v1989 = vpop.f32.mrf.mxu0
  %v1990 = vadd.f32 %v301, %v1989
  %v1991 = vpop.f32.mrf.mxu0
  %1992 = vdwg.mxu0
  %1994 = vrot.lane.b32.xlu0 %v1822, 32
  %v1995 = vpop.permute.xlu0 %1994
  %v1996 = vsel %vm198, %v1995, 0
  %1998 = vmatprep.subr.mxu0 0.0
  %1999 = vmatpush1.msra.mxu0 0.0
  %2000 = vmatprep.subr.mxu0 0.0
  %2001 = vmatpush1.msra.mxu0 0.0
  %2002 = vmatprep.subr.mxu0 0.0
  %2003 = vmatpush1.msra.mxu0 0.0
  %2004 = vmatprep.subr.mxu0 0.0
  %2005 = vmatpush1.msra.mxu0 0.0
  %2006 = vmatprep.subr.mxu0 0.0
  %2007 = vmatpush1.msra.mxu0 0.0
  %2008 = vmatprep.subr.mxu0 0.0
  %2009 = vmatpush1.msra.mxu0 0.0
  %2010 = vmatprep.subr.mxu0 0.0
  %2011 = vmatpush1.msra.mxu0 0.0
  %2012 = vmatprep.subr.mxu0 0.0
  %2013 = vmatpush1.msra.mxu0 0.0
  %2014 = vmatprep.subr.mxu0 0.0
  %2015 = vmatpush1.msra.mxu0 0.0
  %2016 = vmatprep.subr.mxu0 0.0
  %2017 = vmatpush1.msra.mxu0 0.0
  %2018 = vmatprep.subr.mxu0 0.0
  %2019 = vmatpush1.msra.mxu0 0.0
  %2020 = vmatprep.subr.mxu0 0.0
  %2021 = vmatpush1.msra.mxu0 0.0
  %2022 = vmatprep.subr.mxu0 0.0
  %2023 = vmatpush1.msra.mxu0 %v46
  %2024 = vmatprep.subr.mxu0 0.0
  %2025 = vmatpush1.msra.mxu0 %v45
  %2026 = vmatprep.subr.mxu0 0.0
  %2027 = vmatpush1.msra.mxu0 %v44
  %2028 = vmatprep.subr.mxu0 0.0
  %2029 = vmatpush1.msra.mxu0 %v43
  %2030 = vmatprep.subr.mxu0 0.0
  %2031 = vmatpush2.msra.mxu0 0.0
  %2032 = vmatprep.subr.mxu0 0.0
  %2033 = vmatpush2.msra.mxu0 0.0
  %2034 = vmatprep.subr.mxu0 0.0
  %2035 = vmatpush2.msra.mxu0 0.0
  %2036 = vmatprep.subr.mxu0 0.0
  %2037 = vmatpush2.msra.mxu0 0.0
  %2038 = vmatprep.subr.mxu0 0.0
  %2039 = vmatpush2.msra.mxu0 0.0
  %2040 = vmatprep.subr.mxu0 0.0
  %2041 = vmatpush2.msra.mxu0 0.0
  %2042 = vmatprep.subr.mxu0 0.0
  %2043 = vmatpush2.msra.mxu0 0.0
  %2044 = vmatprep.subr.mxu0 0.0
  %2045 = vmatpush2.msra.mxu0 0.0
  %2046 = vmatprep.subr.mxu0 0.0
  %2047 = vmatpush2.msra.mxu0 0.0
  %2048 = vmatprep.subr.mxu0 0.0
  %2049 = vmatpush2.msra.mxu0 0.0
  %2050 = vmatprep.subr.mxu0 0.0
  %2051 = vmatpush2.msra.mxu0 0.0
  %2052 = vmatprep.subr.mxu0 0.0
  %2053 = vmatpush2.msra.mxu0 0.0
  %2054 = vmatprep.subr.mxu0 0.0
  %2055 = vmatpush2.msra.mxu0 0.0
  %2056 = vmatprep.subr.mxu0 0.0
  %2057 = vmatpush2.msra.mxu0 0.0
  %2058 = vmatprep.subr.mxu0 0.0
  %2059 = vmatpush2.msra.mxu0 0.0
  %2060 = vmatprep.subr.mxu0 0.0
  %2061 = vmatpush2.msra.mxu0 0.0
  %2062 = vmatprep.mubr.f32.mxu0 0.0
  %2063 = vmatmul.mubr.f32.gmra.mxu0 %v1996
  %v2064 = vpop.f32.mrf.mxu0
  %v2065 = vadd.f32 0.0, %v2064
  %v2066 = vpop.f32.mrf.mxu0
  %2067 = vdwg.mxu0
  %v2068 = vadd.f32 %v1990, %v2065
  %v2069 = vxor.u32 %v2068, 2147483648
  %v2070 = vmul.f32 %v2069, 1.442695
  %v2071 = vpow.pop %v2070
  %v2072 = vadd.f32 %v2071, 1.0
  %v2073 = vrcp.pop %v2072
  %v2074 = vmul.f32 1.0, %v2073
  %v2075 = vtanh.pop %v2068
  %v2076 = vmul.f32 %v2074, %v1816
  %2078 = vrot.lane.b32.xlu0 %v2075, 64
  %v2079 = vpop.permute.xlu0 %2078
  %v2081 = vmul.f32 %v2074, %v2079
  %2083 = vrot.lane.b32.xlu0 %v2081, 32
  %v2084 = vpop.permute.xlu0 %2083
  %v2086 = vadd.f32 %v2076, %v2084
  %v2087 = vtanh.pop %v2086
  %2089 = vrot.lane.b32.xlu0 %v2087, 64
  %v2090 = vpop.permute.xlu0 %2089
  %v2092 = vmul.f32 %v2074, %v2090
  %2093 = vmatprep.subr.mxu0 0.0
  %2094 = vmatpush1.msra.mxu0 0.0
  %2095 = vmatprep.subr.mxu0 0.0
  %2096 = vmatpush1.msra.mxu0 0.0
  %2097 = vmatprep.subr.mxu0 0.0
  %2098 = vmatpush1.msra.mxu0 0.0
  %2099 = vmatprep.subr.mxu0 0.0
  %2100 = vmatpush1.msra.mxu0 0.0
  %2101 = vmatprep.subr.mxu0 0.0
  %2102 = vmatpush1.msra.mxu0 0.0
  %2103 = vmatprep.subr.mxu0 0.0
  %2104 = vmatpush1.msra.mxu0 0.0
  %2105 = vmatprep.subr.mxu0 0.0
  %2106 = vmatpush1.msra.mxu0 0.0
  %2107 = vmatprep.subr.mxu0 0.0
  %2108 = vmatpush1.msra.mxu0 0.0
  %2109 = vmatprep.subr.mxu0 0.0
  %2110 = vmatpush1.msra.mxu0 0.0
  %2111 = vmatprep.subr.mxu0 0.0
  %2112 = vmatpush1.msra.mxu0 0.0
  %2113 = vmatprep.subr.mxu0 0.0
  %2114 = vmatpush1.msra.mxu0 0.0
  %2115 = vmatprep.subr.mxu0 0.0
  %2116 = vmatpush1.msra.mxu0 0.0
  %2117 = vmatprep.subr.mxu0 0.0
  %2118 = vmatpush1.msra.mxu0 %v42
  %2119 = vmatprep.subr.mxu0 0.0
  %2120 = vmatpush1.msra.mxu0 %v41
  %2121 = vmatprep.subr.mxu0 0.0
  %2122 = vmatpush1.msra.mxu0 %v40
  %2123 = vmatprep.subr.mxu0 0.0
  %2124 = vmatpush1.msra.mxu0 %v39
  %2125 = vmatprep.subr.mxu0 0.0
  %2126 = vmatpush2.msra.mxu0 0.0
  %2127 = vmatprep.subr.mxu0 0.0
  %2128 = vmatpush2.msra.mxu0 0.0
  %2129 = vmatprep.subr.mxu0 0.0
  %2130 = vmatpush2.msra.mxu0 0.0
  %2131 = vmatprep.subr.mxu0 0.0
  %2132 = vmatpush2.msra.mxu0 0.0
  %2133 = vmatprep.subr.mxu0 0.0
  %2134 = vmatpush2.msra.mxu0 0.0
  %2135 = vmatprep.subr.mxu0 0.0
  %2136 = vmatpush2.msra.mxu0 0.0
  %2137 = vmatprep.subr.mxu0 0.0
  %2138 = vmatpush2.msra.mxu0 0.0
  %2139 = vmatprep.subr.mxu0 0.0
  %2140 = vmatpush2.msra.mxu0 0.0
  %2141 = vmatprep.subr.mxu0 0.0
  %2142 = vmatpush2.msra.mxu0 0.0
  %2143 = vmatprep.subr.mxu0 0.0
  %2144 = vmatpush2.msra.mxu0 0.0
  %2145 = vmatprep.subr.mxu0 0.0
  %2146 = vmatpush2.msra.mxu0 0.0
  %2147 = vmatprep.subr.mxu0 0.0
  %2148 = vmatpush2.msra.mxu0 0.0
  %2149 = vmatprep.subr.mxu0 0.0
  %2150 = vmatpush2.msra.mxu0 0.0
  %2151 = vmatprep.subr.mxu0 0.0
  %2152 = vmatpush2.msra.mxu0 0.0
  %2153 = vmatprep.subr.mxu0 0.0
  %2154 = vmatpush2.msra.mxu0 0.0
  %2155 = vmatprep.subr.mxu0 0.0
  %2156 = vmatpush2.msra.mxu0 0.0
  %2157 = vmatprep.mubr.f32.mxu0 0.0
  %2158 = vmatmul.mubr.f32.gmra.mxu0 %v1921
  %v2159 = vpop.f32.mrf.mxu0
  %v2160 = vadd.f32 0.0, %v2159
  %v2161 = vpop.f32.mrf.mxu0
  %2162 = vdwg.mxu0
  %v2163 = vadd.f32 %v195, %v2160
  %v2164 = vxor.u32 %v2163, 2147483648
  %v2165 = vmul.f32 %v2164, 1.442695
  %v2166 = vpow.pop %v2165
  %v2167 = vadd.f32 %v2166, 1.0
  %v2168 = vrcp.pop %v2167
  %v2169 = vmul.f32 1.0, %v2168
  %v2170 = vtanh.pop %v2163
  %v2171 = vmul.f32 %v2169, %v1911
  %2173 = vrot.lane.b32.xlu0 %v2170, 64
  %v2174 = vpop.permute.xlu0 %2173
  %v2176 = vmul.f32 %v2169, %v2174
  %2178 = vrot.lane.b32.xlu0 %v2176, 32
  %v2179 = vpop.permute.xlu0 %2178
  %v2181 = vadd.f32 %v2171, %v2179
  %v2182 = vtanh.pop %v2181
  %2184 = vrot.lane.b32.xlu0 %v2182, 64
  %v2185 = vpop.permute.xlu0 %2184
  %v2187 = vmul.f32 %v2169, %v2185
  %2189 = vrot.lane.b32.xlu0 %v2187, 32
  %v2190 = vpop.permute.xlu0 %2189
  %v2191 = vsel %vm198, %v2190, 0
  %2193 = vmatprep.subr.mxu0 0.0
  %2194 = vmatpush1.msra.mxu0 0.0
  %2195 = vmatprep.subr.mxu0 0.0
  %2196 = vmatpush1.msra.mxu0 0.0
  %2197 = vmatprep.subr.mxu0 0.0
  %2198 = vmatpush1.msra.mxu0 0.0
  %2199 = vmatprep.subr.mxu0 0.0
  %2200 = vmatpush1.msra.mxu0 0.0
  %2201 = vmatprep.subr.mxu0 0.0
  %2202 = vmatpush1.msra.mxu0 0.0
  %2203 = vmatprep.subr.mxu0 0.0
  %2204 = vmatpush1.msra.mxu0 0.0
  %2205 = vmatprep.subr.mxu0 0.0
  %2206 = vmatpush1.msra.mxu0 0.0
  %2207 = vmatprep.subr.mxu0 0.0
  %2208 = vmatpush1.msra.mxu0 0.0
  %2209 = vmatprep.subr.mxu0 0.0
  %2210 = vmatpush1.msra.mxu0 0.0
  %2211 = vmatprep.subr.mxu0 0.0
  %2212 = vmatpush1.msra.mxu0 0.0
  %2213 = vmatprep.subr.mxu0 0.0
  %2214 = vmatpush1.msra.mxu0 0.0
  %2215 = vmatprep.subr.mxu0 0.0
  %2216 = vmatpush1.msra.mxu0 0.0
  %2217 = vmatprep.subr.mxu0 0.0
  %2218 = vmatpush1.msra.mxu0 %v38
  %2219 = vmatprep.subr.mxu0 0.0
  %2220 = vmatpush1.msra.mxu0 %v37
  %2221 = vmatprep.subr.mxu0 0.0
  %2222 = vmatpush1.msra.mxu0 %v36
  %2223 = vmatprep.subr.mxu0 0.0
  %2224 = vmatpush1.msra.mxu0 %v35
  %2225 = vmatprep.subr.mxu0 0.0
  %2226 = vmatpush2.msra.mxu0 0.0
  %2227 = vmatprep.subr.mxu0 0.0
  %2228 = vmatpush2.msra.mxu0 0.0
  %2229 = vmatprep.subr.mxu0 0.0
  %2230 = vmatpush2.msra.mxu0 0.0
  %2231 = vmatprep.subr.mxu0 0.0
  %2232 = vmatpush2.msra.mxu0 0.0
  %2233 = vmatprep.subr.mxu0 0.0
  %2234 = vmatpush2.msra.mxu0 0.0
  %2235 = vmatprep.subr.mxu0 0.0
  %2236 = vmatpush2.msra.mxu0 0.0
  %2237 = vmatprep.subr.mxu0 0.0
  %2238 = vmatpush2.msra.mxu0 0.0
  %2239 = vmatprep.subr.mxu0 0.0
  %2240 = vmatpush2.msra.mxu0 0.0
  %2241 = vmatprep.subr.mxu0 0.0
  %2242 = vmatpush2.msra.mxu0 0.0
  %2243 = vmatprep.subr.mxu0 0.0
  %2244 = vmatpush2.msra.mxu0 0.0
  %2245 = vmatprep.subr.mxu0 0.0
  %2246 = vmatpush2.msra.mxu0 0.0
  %2247 = vmatprep.subr.mxu0 0.0
  %2248 = vmatpush2.msra.mxu0 0.0
  %2249 = vmatprep.subr.mxu0 0.0
  %2250 = vmatpush2.msra.mxu0 0.0
  %2251 = vmatprep.subr.mxu0 0.0
  %2252 = vmatpush2.msra.mxu0 0.0
  %2253 = vmatprep.subr.mxu0 0.0
  %2254 = vmatpush2.msra.mxu0 0.0
  %2255 = vmatprep.subr.mxu0 0.0
  %2256 = vmatpush2.msra.mxu0 0.0
  %2257 = vmatprep.mubr.f32.mxu0 0.0
  %2258 = vmatmul.mubr.f32.gmra.mxu0 %v2191
  %v2259 = vpop.f32.mrf.mxu0
  %v2260 = vadd.f32 %v301, %v2259
  %v2261 = vpop.f32.mrf.mxu0
  %2262 = vdwg.mxu0
  %2264 = vrot.lane.b32.xlu0 %v2092, 32
  %v2265 = vpop.permute.xlu0 %2264
  %v2266 = vsel %vm198, %v2265, 0
  %2268 = vmatprep.subr.mxu0 0.0
  %2269 = vmatpush1.msra.mxu0 0.0
  %2270 = vmatprep.subr.mxu0 0.0
  %2271 = vmatpush1.msra.mxu0 0.0
  %2272 = vmatprep.subr.mxu0 0.0
  %2273 = vmatpush1.msra.mxu0 0.0
  %2274 = vmatprep.subr.mxu0 0.0
  %2275 = vmatpush1.msra.mxu0 0.0
  %2276 = vmatprep.subr.mxu0 0.0
  %2277 = vmatpush1.msra.mxu0 0.0
  %2278 = vmatprep.subr.mxu0 0.0
  %2279 = vmatpush1.msra.mxu0 0.0
  %2280 = vmatprep.subr.mxu0 0.0
  %2281 = vmatpush1.msra.mxu0 0.0
  %2282 = vmatprep.subr.mxu0 0.0
  %2283 = vmatpush1.msra.mxu0 0.0
  %2284 = vmatprep.subr.mxu0 0.0
  %2285 = vmatpush1.msra.mxu0 0.0
  %2286 = vmatprep.subr.mxu0 0.0
  %2287 = vmatpush1.msra.mxu0 0.0
  %2288 = vmatprep.subr.mxu0 0.0
  %2289 = vmatpush1.msra.mxu0 0.0
  %2290 = vmatprep.subr.mxu0 0.0
  %2291 = vmatpush1.msra.mxu0 0.0
  %2292 = vmatprep.subr.mxu0 0.0
  %2293 = vmatpush1.msra.mxu0 %v46
  %2294 = vmatprep.subr.mxu0 0.0
  %2295 = vmatpush1.msra.mxu0 %v45
  %2296 = vmatprep.subr.mxu0 0.0
  %2297 = vmatpush1.msra.mxu0 %v44
  %2298 = vmatprep.subr.mxu0 0.0
  %2299 = vmatpush1.msra.mxu0 %v43
  %2300 = vmatprep.subr.mxu0 0.0
  %2301 = vmatpush2.msra.mxu0 0.0
  %2302 = vmatprep.subr.mxu0 0.0
  %2303 = vmatpush2.msra.mxu0 0.0
  %2304 = vmatprep.subr.mxu0 0.0
  %2305 = vmatpush2.msra.mxu0 0.0
  %2306 = vmatprep.subr.mxu0 0.0
  %2307 = vmatpush2.msra.mxu0 0.0
  %2308 = vmatprep.subr.mxu0 0.0
  %2309 = vmatpush2.msra.mxu0 0.0
  %2310 = vmatprep.subr.mxu0 0.0
  %2311 = vmatpush2.msra.mxu0 0.0
  %2312 = vmatprep.subr.mxu0 0.0
  %2313 = vmatpush2.msra.mxu0 0.0
  %2314 = vmatprep.subr.mxu0 0.0
  %2315 = vmatpush2.msra.mxu0 0.0
  %2316 = vmatprep.subr.mxu0 0.0
  %2317 = vmatpush2.msra.mxu0 0.0
  %2318 = vmatprep.subr.mxu0 0.0
  %2319 = vmatpush2.msra.mxu0 0.0
  %2320 = vmatprep.subr.mxu0 0.0
  %2321 = vmatpush2.msra.mxu0 0.0
  %2322 = vmatprep.subr.mxu0 0.0
  %2323 = vmatpush2.msra.mxu0 0.0
  %2324 = vmatprep.subr.mxu0 0.0
  %2325 = vmatpush2.msra.mxu0 0.0
  %2326 = vmatprep.subr.mxu0 0.0
  %2327 = vmatpush2.msra.mxu0 0.0
  %2328 = vmatprep.subr.mxu0 0.0
  %2329 = vmatpush2.msra.mxu0 0.0
  %2330 = vmatprep.subr.mxu0 0.0
  %2331 = vmatpush2.msra.mxu0 0.0
  %2332 = vmatprep.mubr.f32.mxu0 0.0
  %2333 = vmatmul.mubr.f32.gmra.mxu0 %v2266
  %v2334 = vpop.f32.mrf.mxu0
  %v2335 = vadd.f32 0.0, %v2334
  %v2336 = vpop.f32.mrf.mxu0
  %2337 = vdwg.mxu0
  %v2338 = vadd.f32 %v2260, %v2335
  %v2339 = vxor.u32 %v2338, 2147483648
  %v2340 = vmul.f32 %v2339, 1.442695
  %v2341 = vpow.pop %v2340
  %v2342 = vadd.f32 %v2341, 1.0
  %v2343 = vrcp.pop %v2342
  %v2344 = vmul.f32 1.0, %v2343
  %v2345 = vtanh.pop %v2338
  %v2346 = vmul.f32 %v2344, %v2086
  %2348 = vrot.lane.b32.xlu0 %v2345, 64
  %v2349 = vpop.permute.xlu0 %2348
  %v2351 = vmul.f32 %v2344, %v2349
  %2353 = vrot.lane.b32.xlu0 %v2351, 32
  %v2354 = vpop.permute.xlu0 %2353
  %v2356 = vadd.f32 %v2346, %v2354
  %v2357 = vtanh.pop %v2356
  %2359 = vrot.lane.b32.xlu0 %v2357, 64
  %v2360 = vpop.permute.xlu0 %2359
  %v2362 = vmul.f32 %v2344, %v2360
  %v2364 = vlaneseq
  %v2365 = vshrl.u32 %v2364, 7
  %v2366 = vsub.s32 0, %v2365
  %v2367 = vrot.slane %v53, %v2366
  %2370 = vrot.lane.b32.xlu0 %v2362, 32
  %v2371 = vpop.permute.xlu0 %2370
  %v2372 = vsel %vm198, %v2371, 0
  %2374 = vmatprep.subr.mxu0 0.0
  %2375 = vmatpush1.msra.mxu0 0.0
  %2376 = vmatprep.subr.mxu0 0.0
  %2377 = vmatpush1.msra.mxu0 0.0
  %2378 = vmatprep.subr.mxu0 0.0
  %2379 = vmatpush1.msra.mxu0 0.0
  %2380 = vmatprep.subr.mxu0 0.0
  %2381 = vmatpush1.msra.mxu0 0.0
  %2382 = vmatprep.subr.mxu0 0.0
  %2383 = vmatpush1.msra.mxu0 0.0
  %2384 = vmatprep.subr.mxu0 0.0
  %2385 = vmatpush1.msra.mxu0 0.0
  %2386 = vmatprep.subr.mxu0 0.0
  %2387 = vmatpush1.msra.mxu0 0.0
  %2388 = vmatprep.subr.mxu0 0.0
  %2389 = vmatpush1.msra.mxu0 0.0
  %2390 = vmatprep.subr.mxu0 0.0
  %2391 = vmatpush1.msra.mxu0 0.0
  %2392 = vmatprep.subr.mxu0 0.0
  %2393 = vmatpush1.msra.mxu0 0.0
  %2394 = vmatprep.subr.mxu0 0.0
  %2395 = vmatpush1.msra.mxu0 0.0
  %2396 = vmatprep.subr.mxu0 0.0
  %2397 = vmatpush1.msra.mxu0 0.0
  %2398 = vmatprep.subr.mxu0 0.0
  %2399 = vmatpush1.msra.mxu0 %v52
  %2400 = vmatprep.subr.mxu0 0.0
  %2401 = vmatpush1.msra.mxu0 %v51
  %2402 = vmatprep.subr.mxu0 0.0
  %2403 = vmatpush1.msra.mxu0 %v50
  %2404 = vmatprep.subr.mxu0 0.0
  %2405 = vmatpush1.msra.mxu0 %v49
  %2406 = vmatprep.subr.mxu0 0.0
  %2407 = vmatpush2.msra.mxu0 0.0
  %2408 = vmatprep.subr.mxu0 0.0
  %2409 = vmatpush2.msra.mxu0 0.0
  %2410 = vmatprep.subr.mxu0 0.0
  %2411 = vmatpush2.msra.mxu0 0.0
  %2412 = vmatprep.subr.mxu0 0.0
  %2413 = vmatpush2.msra.mxu0 0.0
  %2414 = vmatprep.subr.mxu0 0.0
  %2415 = vmatpush2.msra.mxu0 0.0
  %2416 = vmatprep.subr.mxu0 0.0
  %2417 = vmatpush2.msra.mxu0 0.0
  %2418 = vmatprep.subr.mxu0 0.0
  %2419 = vmatpush2.msra.mxu0 0.0
  %2420 = vmatprep.subr.mxu0 0.0
  %2421 = vmatpush2.msra.mxu0 0.0
  %2422 = vmatprep.subr.mxu0 0.0
  %2423 = vmatpush2.msra.mxu0 0.0
  %2424 = vmatprep.subr.mxu0 0.0
  %2425 = vmatpush2.msra.mxu0 0.0
  %2426 = vmatprep.subr.mxu0 0.0
  %2427 = vmatpush2.msra.mxu0 0.0
  %2428 = vmatprep.subr.mxu0 0.0
  %2429 = vmatpush2.msra.mxu0 0.0
  %2430 = vmatprep.subr.mxu0 0.0
  %2431 = vmatpush2.msra.mxu0 0.0
  %2432 = vmatprep.subr.mxu0 0.0
  %2433 = vmatpush2.msra.mxu0 0.0
  %2434 = vmatprep.subr.mxu0 0.0
  %2435 = vmatpush2.msra.mxu0 0.0
  %2436 = vmatprep.subr.mxu0 0.0
  %2437 = vmatpush2.msra.mxu0 0.0
  %2438 = vmatprep.mubr.f32.mxu0 0.0
  %2439 = vmatmul.mubr.f32.gmra.mxu0 %v2372
  %v2440 = vpop.f32.mrf.mxu0
  %v2441 = vadd.f32 %v2367, %v2440
  %v2442 = vpop.f32.mrf.mxu0
  %2443 = vdwg.mxu0
  %v2444 = vmax.f32 %v2441, 0.0
  %vm2445 = vcmask 523264
  %2446 = vst.msk [vmem:[%s9] sm:$0xff] %vm2445, %v2444
  // Predicated region
  $region38: #{lstm_branch_forward.1} parent=0 // pred_check
    _
  $region39: #{lstm_branch_forward.1} parent=0 // pred_check_branch
    %2448 = sbr.rel (0) target = $region41
  $region40: #{lstm_branch_forward.1} parent=0 // pred_region
    _
  $region41: #{lstm_branch_forward.1} parent=0 // pred_fallthru
    _
  // Predicated region
  $region42: #{lstm_branch_forward.1} parent=0 // pred_check
    _
  $region43: #{lstm_branch_forward.1} parent=0 // pred_check_branch
    %2450 = sbr.rel (0) target = $region45
  $region44: #{lstm_branch_forward.1} parent=0 // pred_region
    _
  $region45: #{lstm_branch_forward.1} parent=0 // pred_fallthru
    _

</llo_original>
